<compile_context>
chip_gen: v7x
topology: tpu7x:2x2x1
jax: 0.10.0
libtpu: 0.0.40
codegen_flags: <defaults>
</compile_context>

<pallas_src>
import functools

import jax
import jax.numpy as jnp
from jax import lax
from jax.experimental import pallas as pl
from jax.experimental.pallas import tpu as pltpu


def _ocr_kernel(x_ref, p_ref,
                wp1_ref, sp1_ref, bp1_ref,
                wp2_ref, sp2_ref, bp2_ref,
                wkv_ref,
                wup_ref, sup_ref, bup_ref,
                woc_ref, wox_ref, so_ref, bo_ref,
                o_ref,
                k_scr, v_scr, m_scr, l_scr, sim_scr,
                *, ck):
    bf16 = jnp.bfloat16
    pass_id = pl.program_id(1)
    t = pl.program_id(2)

    # ---------------- pass 0: similarity + softmax statistics ----------------
    @pl.when(pass_id == 0)
    def _pass0():
        # per-batch init: key/value once, reset running softmax stats
        @pl.when(t == 0)
        def _init():
            kv = jnp.dot(wkv_ref[...], p_ref[0],
                         preferred_element_type=jnp.float32)        # (2*Ck, M)
            k_scr[...] = kv[:ck].astype(bf16)
            v_scr[...] = kv[ck:].astype(bf16)
            m_scr[...] = jnp.full(m_scr.shape, -jnp.inf, m_scr.dtype)
            l_scr[...] = jnp.zeros(l_scr.shape, l_scr.dtype)

        x = x_ref[0]                                                 # (Cin, tn) bf16
        # f_pixel: conv1x1 -> BN -> ReLU -> conv1x1 -> BN -> ReLU (scale 1/sqrt(Ck) folded)
        q = jnp.dot(wp1_ref[...], x, preferred_element_type=jnp.float32)
        q = jnp.maximum(q * sp1_ref[...] + bp1_ref[...], 0.0)
        q = jnp.dot(wp2_ref[...], q.astype(bf16),
                    preferred_element_type=jnp.float32)
        q = jnp.maximum(q * sp2_ref[...] + bp2_ref[...], 0.0)        # (Ck, tn)

        # sim_T = key^T @ query  -> (M, tn); softmax reduction is along the lane axis
        sim = lax.dot_general(k_scr[...], q.astype(bf16),
                              (((0,), (0,)), ((), ())),
                              preferred_element_type=jnp.float32)    # (M, tn)
        sim_scr[t] = sim

        tmax = jnp.max(sim, axis=1, keepdims=True)                   # (M, 1)
        m_old = m_scr[...]
        m_new = jnp.maximum(m_old, tmax)
        l_scr[...] = (l_scr[...] * jnp.exp(m_old - m_new)
                      + jnp.sum(jnp.exp(sim - m_new), axis=1, keepdims=True))
        m_scr[...] = m_new

    # ---------------- pass 1: normalize, context, f_up, fused output ----------------
    @pl.when(pass_id == 1)
    def _pass1():
        x = x_ref[0]                                                 # (Cin, tn) bf16
        # attention probs for this tile (softmax over the pixel axis, done globally)
        e = (jnp.exp(sim_scr[t] - m_scr[...])
             * pl.reciprocal(l_scr[...], approx=True))               # (M, tn)

        # context^T = value @ attn^T
        ctx = jnp.dot(v_scr[...], e.astype(bf16),
                      preferred_element_type=jnp.float32)            # (Ck, tn)
        # f_up: conv1x1 -> BN -> ReLU
        ctx = jnp.dot(wup_ref[...], ctx.astype(bf16),
                      preferred_element_type=jnp.float32)
        ctx = jnp.maximum(ctx * sup_ref[...] + bup_ref[...], 0.0)    # (Cin, tn)

        # conv_bn_dropout on cat([context, feats]): split-weight matmul avoids concat
        out = (jnp.dot(woc_ref[...], ctx.astype(bf16),
                       preferred_element_type=jnp.float32)
               + jnp.dot(wox_ref[...], x, preferred_element_type=jnp.float32))
        out = jnp.maximum(out * so_ref[...] + bo_ref[...], 0.0)      # (Cout, tn)
        # TODO(synk): Dropout2d is stochastic in train mode; implemented as eval-mode identity.
        o_ref[0] = out


def _pick_tile_n(n, target=512):
    """Largest clean pixel tile <= target (halve `target` when targeting v7x's 64 MiB VMEM)."""
    if n <= target:
        return n
    for cand in (target, 384, 256, 128):
        if n % cand == 0:
            return cand
    return n  # odd sizes: fall back to no tiling


def spatial_ocr_module(feats, proxy, params):
    """feats: (B, Cin, H, W). proxy: (B, Cin, Hp, Wp). Returns (B, Cout, H, W) float32."""
    B, Cin, H, W = feats.shape
    _, _, Hp, Wp = proxy.shape
    N, M = H * W, Hp * Wp
    Ck = params["w_p1"].shape[0]
    Cout = params["w_out"].shape[0]

    tile_n = _pick_tile_n(N)
    assert N % tile_n == 0
    nt = N // tile_n

    bf16 = jnp.bfloat16
    # free reshapes + bf16 cast at the boundary (halves HBM traffic of the big streams)
    x = feats.reshape(B, Cin, N).astype(bf16)
    p = proxy.reshape(B, Cin, M).astype(bf16)

    inv_sqrt_key = float(Ck) ** -0.5
    w_p1 = params["w_p1"].astype(bf16)
    w_p2 = params["w_p2"].astype(bf16)
    w_kv = jnp.concatenate([params["w_obj"], params["w_down"]], axis=0).astype(bf16)
    w_up = params["w_up"].astype(bf16)
    w_oc = params["w_out"][:, :Cin].astype(bf16)   # acts on context half of the concat
    w_ox = params["w_out"][:, Cin:].astype(bf16)   # acts on feats half of the concat
    s_p1, b_p1 = params["s_p1"], params["b_p1"]
    s_p2 = params["s_p2"] * inv_sqrt_key           # fold key_channels**-0.5 (scale > 0)
    b_p2 = params["b_p2"] * inv_sqrt_key
    s_up, b_up = params["s_up"], params["b_up"]
    s_o, b_o = params["s_out"], params["b_out"]

    weights = [w_p1, s_p1, b_p1, w_p2, s_p2, b_p2, w_kv,
               w_up, s_up, b_up, w_oc, w_ox, s_o, b_o]
    # NOTE: weights use a constant index_map so they are DMA'd once; at production channel
    # sizes consider pipeline_mode=pl.Buffered(1) to drop their redundant double buffer.
    weight_specs = [pl.BlockSpec(w.shape, lambda b, s, t: (0, 0)) for w in weights]

    # VMEM budget estimate (double-buffered I/O + resident weights + scratch), with headroom.
    w_bytes = sum(int(w.size) * w.dtype.itemsize for w in weights)
    est = (2 * (Cin * tile_n * 2 + Cin * M * 2 + Cout * tile_n * 4 + w_bytes)
           + 2 * Ck * M * 2 + 2 * M * 4 + nt * M * tile_n * 4 + (2 << 20))
    vmem_limit = int(min(max(est, 32 * 1024 * 1024), 64 * 1024 * 1024))

    kernel = functools.partial(_ocr_kernel, ck=Ck)

    out = pl.pallas_call(
        kernel,
        out_shape=jax.ShapeDtypeStruct((B, Cout, N), jnp.float32),
        grid_spec=pltpu.PrefetchScalarGridSpec(
            num_scalar_prefetch=0,
            grid=(B, 2, nt),                       # (batch, softmax pass, pixel tile)
            in_specs=[
                pl.BlockSpec((1, Cin, tile_n), lambda b, s, t: (b, 0, t)),
                pl.BlockSpec((1, Cin, M), lambda b, s, t: (b, 0, 0)),
                *weight_specs,
            ],
            # During the stats pass (s=0) the output stays resident on block (b,0,0) and is
            # only written/flushed during pass 1 -> no wasted HBM writebacks.
            out_specs=pl.BlockSpec((1, Cout, tile_n), lambda b, s, t: (b, 0, s * t)),
            scratch_shapes=[
                pltpu.VMEM((Ck, M), bf16),              # key   (per batch)
                pltpu.VMEM((Ck, M), bf16),              # value (per batch)
                pltpu.VMEM((M, 1), jnp.float32),        # running max   (per object region)
                pltpu.VMEM((M, 1), jnp.float32),        # running sumexp(per object region)
                pltpu.VMEM((nt, M, tile_n), jnp.float32),  # cached sim_T (M is tiny)
            ],
        ),
        compiler_params=pltpu.CompilerParams(
            dimension_semantics=("parallel", "arbitrary", "arbitrary"),
            vmem_limit_bytes=vmem_limit,
        ),
    )(x, p, *weights)

    return out.reshape(B, Cout, H, W)


def make_params(key, in_channels, key_channels, out_channels):
    """Deterministic synthetic weights, channel-first (Cout, Cin). BN folded to (scale, bias)."""
    ks = jax.random.split(key, 12)

    def conv_w(k, cout, cin):
        return jax.random.normal(k, (cout, cin), jnp.float32) * 0.1

    def bn_fold(k, c):
        k1, k2, k3, k4 = jax.random.split(k, 4)
        gamma = 1.0 + 0.1 * jax.random.normal(k1, (c, 1), jnp.float32)
        beta = 0.1 * jax.random.normal(k2, (c, 1), jnp.float32)
        mean = 0.1 * jax.random.normal(k3, (c, 1), jnp.float32)
        var = jnp.abs(jax.random.normal(k4, (c, 1), jnp.float32)) + 0.5
        scale = gamma / jnp.sqrt(var + 1e-5)
        bias = beta - mean * scale
        return scale, bias

    s_p1, b_p1 = bn_fold(ks[1], key_channels)
    s_p2, b_p2 = bn_fold(ks[3], key_channels)
    s_up, b_up = bn_fold(ks[7], in_channels)
    s_out, b_out = bn_fold(ks[10], out_channels)

    return dict(
        w_p1=conv_w(ks[0], key_channels, in_channels), s_p1=s_p1, b_p1=b_p1,
        w_p2=conv_w(ks[2], key_channels, key_channels), s_p2=s_p2, b_p2=b_p2,
        w_obj=conv_w(ks[4], key_channels, in_channels),
        w_down=conv_w(ks[5], key_channels, in_channels),
        w_up=conv_w(ks[6], in_channels, key_channels), s_up=s_up, b_up=b_up,
        w_out=conv_w(ks[8], out_channels, 2 * in_channels),
        s_out=s_out, b_out=b_out,
    )


def _reference(feats, proxy, params, key_channels):
    """Pure-JAX f32 reference reproducing the PyTorch forward (softmax over dim=1 / pixels)."""
    B, Cin, H, W = feats.shape
    N = H * W
    M = proxy.shape[2] * proxy.shape[3]
    x = feats.reshape(B, Cin, N)
    p = proxy.reshape(B, Cin, M)

    def conv(w, t):  # 1x1 conv: (Co, Ci) applied over channel dim of (B, Ci, L)
        return jnp.einsum("oc,bcl->bol", w, t)

    q = jnp.maximum(conv(params["w_p1"], x) * params["s_p1"] + params["b_p1"], 0.0)
    q = jnp.maximum(conv(params["w_p2"], q) * params["s_p2"] + params["b_p2"], 0.0)
    k = conv(params["w_obj"], p)
    v = conv(params["w_down"], p)
    sim = jnp.einsum("bcn,bcm->bnm", q, k) * (key_channels ** -0.5)
    attn = jax.nn.softmax(sim, axis=1)                  # dim=1 (pixel axis), as in PyTorch
    ctx = jnp.einsum("bnm,bcm->bcn", attn, v)
    ctx = jnp.maximum(conv(params["w_up"], ctx) * params["s_up"] + params["b_up"], 0.0)
    cat = jnp.concatenate([ctx, x], axis=1)
    out = jnp.maximum(conv(params["w_out"], cat) * params["s_out"] + params["b_out"], 0.0)
    return out.reshape(B, -1, H, W)


if __name__ == "__main__":
    B, Cin, Ck, Cout = 2, 32, 16, 32
    H = W = 8          # N = 64 pixels
    Hp, Wp = 8, 1      # M = 8 object-region proxies

    root = jax.random.PRNGKey(0)
    k_feat, k_proxy, k_param = jax.random.split(root, 3)
    feats = jax.random.normal(k_feat, (B, Cin, H, W), jnp.float32)
    proxy = jax.random.normal(k_proxy, (B, Cin, Hp, Wp), jnp.float32)
    params = make_params(k_param, Cin, Ck, Cout)

    out = jax.block_until_ready(spatial_ocr_module(feats, proxy, params))
    ref = jax.block_until_ready(_reference(feats, proxy, params, Ck))

    assert out.shape == (B, Cout, H, W)
    # bf16 MXU operands loosen the tolerance vs the pure-f32 reference.
    max_err = float(jnp.max(jnp.abs(out - ref)))
    ref_scale = float(jnp.max(jnp.abs(ref)))
    assert max_err <= 5e-2 * ref_scale + 1e-5, f"mismatch: max|err|={max_err} scale={ref_scale}"
    print("KERNEL_OK")
</pallas_src>

<mosaic_0001>
module attributes {stable_mosaic.version = 11 : i64} {
  func.func @_ocr_kernel(%arg0: i32, %arg1: i32, %arg2: i32, %arg3: memref<1x32x64xbf16, #tpu.memory_space<vmem>>, %arg4: memref<1x32x8xbf16, #tpu.memory_space<vmem>>, %arg5: memref<16x32xbf16, #tpu.memory_space<vmem>>, %arg6: memref<16x1xf32, #tpu.memory_space<vmem>>, %arg7: memref<16x1xf32, #tpu.memory_space<vmem>>, %arg8: memref<16x16xbf16, #tpu.memory_space<vmem>>, %arg9: memref<16x1xf32, #tpu.memory_space<vmem>>, %arg10: memref<16x1xf32, #tpu.memory_space<vmem>>, %arg11: memref<32x32xbf16, #tpu.memory_space<vmem>>, %arg12: memref<32x16xbf16, #tpu.memory_space<vmem>>, %arg13: memref<32x1xf32, #tpu.memory_space<vmem>>, %arg14: memref<32x1xf32, #tpu.memory_space<vmem>>, %arg15: memref<32x32xbf16, #tpu.memory_space<vmem>>, %arg16: memref<32x32xbf16, #tpu.memory_space<vmem>>, %arg17: memref<32x1xf32, #tpu.memory_space<vmem>>, %arg18: memref<32x1xf32, #tpu.memory_space<vmem>>, %arg19: memref<1x32x64xf32, #tpu.memory_space<vmem>>, %arg20: memref<16x8xbf16, #tpu.memory_space<vmem>>, %arg21: memref<16x8xbf16, #tpu.memory_space<vmem>>, %arg22: memref<8x1xf32, #tpu.memory_space<vmem>>, %arg23: memref<8x1xf32, #tpu.memory_space<vmem>>, %arg24: memref<1x8x64xf32, #tpu.memory_space<vmem>>) attributes {dimension_semantics = [#tpu.dimension_semantics<parallel>, #tpu.dimension_semantics<arbitrary>, #tpu.dimension_semantics<arbitrary>], iteration_bounds = array<i64: 2, 2, 1>, scalar_prefetch = 0 : i64, scratch_operands = 5 : i64, tpu.core_type = #tpu.core_type<tc>, window_params = [{transform_indices = @transform_0, window_bounds = array<i64: 1, 32, 64>}, {transform_indices = @transform_1, window_bounds = array<i64: 1, 32, 8>}, {pipeline_mode = #tpu.pipeline_mode<synchronous>, transform_indices = @transform_2, window_bounds = array<i64: 16, 32>}, {pipeline_mode = #tpu.pipeline_mode<synchronous>, transform_indices = @transform_3, window_bounds = array<i64: 16, 1>}, {pipeline_mode = #tpu.pipeline_mode<synchronous>, transform_indices = @transform_4, window_bounds = array<i64: 16, 1>}, {pipeline_mode = #tpu.pipeline_mode<synchronous>, transform_indices = @transform_5, window_bounds = array<i64: 16, 16>}, {pipeline_mode = #tpu.pipeline_mode<synchronous>, transform_indices = @transform_6, window_bounds = array<i64: 16, 1>}, {pipeline_mode = #tpu.pipeline_mode<synchronous>, transform_indices = @transform_7, window_bounds = array<i64: 16, 1>}, {pipeline_mode = #tpu.pipeline_mode<synchronous>, transform_indices = @transform_8, window_bounds = array<i64: 32, 32>}, {pipeline_mode = #tpu.pipeline_mode<synchronous>, transform_indices = @transform_9, window_bounds = array<i64: 32, 16>}, {pipeline_mode = #tpu.pipeline_mode<synchronous>, transform_indices = @transform_10, window_bounds = array<i64: 32, 1>}, {pipeline_mode = #tpu.pipeline_mode<synchronous>, transform_indices = @transform_11, window_bounds = array<i64: 32, 1>}, {pipeline_mode = #tpu.pipeline_mode<synchronous>, transform_indices = @transform_12, window_bounds = array<i64: 32, 32>}, {pipeline_mode = #tpu.pipeline_mode<synchronous>, transform_indices = @transform_13, window_bounds = array<i64: 32, 32>}, {pipeline_mode = #tpu.pipeline_mode<synchronous>, transform_indices = @transform_14, window_bounds = array<i64: 32, 1>}, {pipeline_mode = #tpu.pipeline_mode<synchronous>, transform_indices = @transform_15, window_bounds = array<i64: 32, 1>}, {transform_indices = @transform_16, window_bounds = array<i64: 1, 32, 64>}]} {
    %c0_i32 = arith.constant 0 : i32
    %0 = arith.cmpi eq, %arg1, %c0_i32 : i32
    %1 = arith.extui %0 : i1 to i32
    %c0_i32_0 = arith.constant 0 : i32
    %2 = arith.cmpi ne, %1, %c0_i32_0 : i32
    scf.if %2 {
      %c0_i32_2 = arith.constant 0 : i32
      %6 = arith.cmpi eq, %arg2, %c0_i32_2 : i32
      %7 = arith.extui %6 : i1 to i32
      %c0_i32_3 = arith.constant 0 : i32
      %8 = arith.cmpi ne, %7, %c0_i32_3 : i32
      scf.if %8 {
        %c0_36 = arith.constant 0 : index
        %c0_37 = arith.constant 0 : index
        %55 = vector.load %arg11[%c0_36, %c0_37] : memref<32x32xbf16, #tpu.memory_space<vmem>>, vector<32x32xbf16>
        %c0_38 = arith.constant 0 : index
        %c0_39 = arith.constant 0 : index
        %c0_40 = arith.constant 0 : index
        %56 = vector.load %arg4[%c0_38, %c0_39, %c0_40] : memref<1x32x8xbf16, #tpu.memory_space<vmem>>, vector<1x32x8xbf16>
        %57 = vector.shape_cast %56 : vector<1x32x8xbf16> to vector<32x8xbf16>
        %cst_41 = arith.constant dense<0.000000e+00> : vector<32x8xf32>
        %58 = tpu.matmul %55, %57, %cst_41 {dimension_numbers = #tpu.dot_dimension_numbers<[1], [0], [0], [1], [0, 0, 1, 1], [], []>} : vector<32x32xbf16>, vector<32x8xbf16>, vector<32x8xf32> -> vector<32x8xf32>
        %59 = vector.extract_strided_slice %58 {offsets = [0, 0], sizes = [16, 8], strides = [1, 1]} : vector<32x8xf32> to vector<16x8xf32>
        %60 = arith.truncf %59 : vector<16x8xf32> to vector<16x8xbf16>
        %c0_42 = arith.constant 0 : index
        %c0_43 = arith.constant 0 : index
        %61 = vector.load %arg20[%c0_42, %c0_43] : memref<16x8xbf16, #tpu.memory_space<vmem>>, vector<16x8xbf16>
        tpu.vector_store %arg20[%c0_42, %c0_43], %60 {strides = array<i32>} : memref<16x8xbf16, #tpu.memory_space<vmem>>, vector<16x8xbf16>,
        %62 = vector.extract_strided_slice %58 {offsets = [16, 0], sizes = [16, 8], strides = [1, 1]} : vector<32x8xf32> to vector<16x8xf32>
        %63 = arith.truncf %62 : vector<16x8xf32> to vector<16x8xbf16>
        %c0_44 = arith.constant 0 : index
        %c0_45 = arith.constant 0 : index
        %64 = vector.load %arg21[%c0_44, %c0_45] : memref<16x8xbf16, #tpu.memory_space<vmem>>, vector<16x8xbf16>
        tpu.vector_store %arg21[%c0_44, %c0_45], %63 {strides = array<i32>} : memref<16x8xbf16, #tpu.memory_space<vmem>>, vector<16x8xbf16>,
        %cst_46 = arith.constant 0xFF800000 : f32
        %65 = vector.broadcast %cst_46 : f32 to vector<8x1xf32>
        %c0_47 = arith.constant 0 : index
        %c0_48 = arith.constant 0 : index
        %66 = vector.load %arg22[%c0_47, %c0_48] : memref<8x1xf32, #tpu.memory_space<vmem>>, vector<8x1xf32>
        tpu.vector_store %arg22[%c0_47, %c0_48], %65 {strides = array<i32>} : memref<8x1xf32, #tpu.memory_space<vmem>>, vector<8x1xf32>,
        %cst_49 = arith.constant 0.000000e+00 : f32
        %67 = vector.broadcast %cst_49 : f32 to vector<8x1xf32>
        %c0_50 = arith.constant 0 : index
        %c0_51 = arith.constant 0 : index
        %68 = vector.load %arg23[%c0_50, %c0_51] : memref<8x1xf32, #tpu.memory_space<vmem>>, vector<8x1xf32>
        tpu.vector_store %arg23[%c0_50, %c0_51], %67 {strides = array<i32>} : memref<8x1xf32, #tpu.memory_space<vmem>>, vector<8x1xf32>,
      } else {
      }
      %c0 = arith.constant 0 : index
      %c0_4 = arith.constant 0 : index
      %c0_5 = arith.constant 0 : index
      %9 = vector.load %arg3[%c0, %c0_4, %c0_5] : memref<1x32x64xbf16, #tpu.memory_space<vmem>>, vector<1x32x64xbf16>
      %10 = vector.shape_cast %9 : vector<1x32x64xbf16> to vector<32x64xbf16>
      %c0_6 = arith.constant 0 : index
      %c0_7 = arith.constant 0 : index
      %11 = vector.load %arg5[%c0_6, %c0_7] : memref<16x32xbf16, #tpu.memory_space<vmem>>, vector<16x32xbf16>
      %cst = arith.constant dense<0.000000e+00> : vector<16x64xf32>
      %12 = tpu.matmul %11, %10, %cst {dimension_numbers = #tpu.dot_dimension_numbers<[1], [0], [0], [1], [0, 0, 1, 1], [], []>} : vector<16x32xbf16>, vector<32x64xbf16>, vector<16x64xf32> -> vector<16x64xf32>
      %c0_8 = arith.constant 0 : index
      %c0_9 = arith.constant 0 : index
      %13 = vector.load %arg6[%c0_8, %c0_9] : memref<16x1xf32, #tpu.memory_space<vmem>>, vector<16x1xf32>
      %14 = vector.broadcast %13 : vector<16x1xf32> to vector<16x64xf32>
      %15 = arith.mulf %12, %14 : vector<16x64xf32>
      %c0_10 = arith.constant 0 : index
      %c0_11 = arith.constant 0 : index
      %16 = vector.load %arg7[%c0_10, %c0_11] : memref<16x1xf32, #tpu.memory_space<vmem>>, vector<16x1xf32>
      %17 = vector.broadcast %16 : vector<16x1xf32> to vector<16x64xf32>
      %18 = arith.addf %15, %17 : vector<16x64xf32>
      %cst_12 = arith.constant 0.000000e+00 : f32
      %19 = vector.broadcast %cst_12 : f32 to vector<16x64xf32>
      %20 = arith.maximumf %18, %19 : vector<16x64xf32>
      %c0_13 = arith.constant 0 : index
      %c0_14 = arith.constant 0 : index
      %21 = vector.load %arg8[%c0_13, %c0_14] : memref<16x16xbf16, #tpu.memory_space<vmem>>, vector<16x16xbf16>
      %22 = arith.truncf %20 : vector<16x64xf32> to vector<16x64xbf16>
      %cst_15 = arith.constant dense<0.000000e+00> : vector<16x64xf32>
      %23 = tpu.matmul %21, %22, %cst_15 {dimension_numbers = #tpu.dot_dimension_numbers<[1], [0], [0], [1], [0, 0, 1, 1], [], []>} : vector<16x16xbf16>, vector<16x64xbf16>, vector<16x64xf32> -> vector<16x64xf32>
      %c0_16 = arith.constant 0 : index
      %c0_17 = arith.constant 0 : index
      %24 = vector.load %arg9[%c0_16, %c0_17] : memref<16x1xf32, #tpu.memory_space<vmem>>, vector<16x1xf32>
      %25 = vector.broadcast %24 : vector<16x1xf32> to vector<16x64xf32>
      %26 = arith.mulf %23, %25 : vector<16x64xf32>
      %c0_18 = arith.constant 0 : index
      %c0_19 = arith.constant 0 : index
      %27 = vector.load %arg10[%c0_18, %c0_19] : memref<16x1xf32, #tpu.memory_space<vmem>>, vector<16x1xf32>
      %28 = vector.broadcast %27 : vector<16x1xf32> to vector<16x64xf32>
      %29 = arith.addf %26, %28 : vector<16x64xf32>
      %cst_20 = arith.constant 0.000000e+00 : f32
      %30 = vector.broadcast %cst_20 : f32 to vector<16x64xf32>
      %31 = arith.maximumf %29, %30 : vector<16x64xf32>
      %c0_21 = arith.constant 0 : index
      %c0_22 = arith.constant 0 : index
      %32 = vector.load %arg20[%c0_21, %c0_22] : memref<16x8xbf16, #tpu.memory_space<vmem>>, vector<16x8xbf16>
      %33 = arith.truncf %31 : vector<16x64xf32> to vector<16x64xbf16>
      %cst_23 = arith.constant dense<0.000000e+00> : vector<8x64xf32>
      %34 = tpu.matmul %32, %33, %cst_23 {dimension_numbers = #tpu.dot_dimension_numbers<[0], [0], [1], [1], [0, 1, 1, 1], [], []>} : vector<16x8xbf16>, vector<16x64xbf16>, vector<8x64xf32> -> vector<8x64xf32>
      %35 = arith.index_cast %arg2 : i32 to index
      %c0_24 = arith.constant 0 : index
      %c0_25 = arith.constant 0 : index
      %36 = vector.load %arg24[%35, %c0_24, %c0_25] : memref<1x8x64xf32, #tpu.memory_space<vmem>>, vector<1x8x64xf32>
      %37 = vector.shape_cast %36 : vector<1x8x64xf32> to vector<8x64xf32>
      %38 = vector.shape_cast %34 : vector<8x64xf32> to vector<1x8x64xf32>
      tpu.vector_store %arg24[%35, %c0_24, %c0_25], %38 {strides = array<i32>} : memref<1x8x64xf32, #tpu.memory_space<vmem>>, vector<1x8x64xf32>,
      %cst_26 = arith.constant dense<0xFF800000> : vector<8xf32>
      %39 = vector.multi_reduction <maximumf>, %34, %cst_26 [1] : vector<8x64xf32> to vector<8xf32>
      %40 = vector.shape_cast %39 : vector<8xf32> to vector<8x1xf32>
      %c0_27 = arith.constant 0 : index
      %c0_28 = arith.constant 0 : index
      %41 = vector.load %arg22[%c0_27, %c0_28] : memref<8x1xf32, #tpu.memory_space<vmem>>, vector<8x1xf32>
      %42 = arith.maximumf %41, %40 : vector<8x1xf32>
      %c0_29 = arith.constant 0 : index
      %c0_30 = arith.constant 0 : index
      %43 = vector.load %arg23[%c0_29, %c0_30] : memref<8x1xf32, #tpu.memory_space<vmem>>, vector<8x1xf32>
      %44 = arith.subf %41, %42 : vector<8x1xf32>
      %45 = math.exp %44 : vector<8x1xf32>
      %46 = arith.mulf %43, %45 : vector<8x1xf32>
      %47 = vector.broadcast %42 : vector<8x1xf32> to vector<8x64xf32>
      %48 = arith.subf %34, %47 : vector<8x64xf32>
      %49 = math.exp %48 : vector<8x64xf32>
      %cst_31 = arith.constant dense<0.000000e+00> : vector<8xf32>
      %50 = vector.multi_reduction <add>, %49, %cst_31 [1] : vector<8x64xf32> to vector<8xf32>
      %51 = vector.shape_cast %50 : vector<8xf32> to vector<8x1xf32>
      %52 = arith.addf %46, %51 : vector<8x1xf32>
      %c0_32 = arith.constant 0 : index
      %c0_33 = arith.constant 0 : index
      %53 = vector.load %arg23[%c0_32, %c0_33] : memref<8x1xf32, #tpu.memory_space<vmem>>, vector<8x1xf32>
      tpu.vector_store %arg23[%c0_32, %c0_33], %52 {strides = array<i32>} : memref<8x1xf32, #tpu.memory_space<vmem>>, vector<8x1xf32>,
      %c0_34 = arith.constant 0 : index
      %c0_35 = arith.constant 0 : index
      %54 = vector.load %arg22[%c0_34, %c0_35] : memref<8x1xf32, #tpu.memory_space<vmem>>, vector<8x1xf32>
      tpu.vector_store %arg22[%c0_34, %c0_35], %42 {strides = array<i32>} : memref<8x1xf32, #tpu.memory_space<vmem>>, vector<8x1xf32>,
    } else {
    }
    %c1_i32 = arith.constant 1 : i32
    %3 = arith.cmpi eq, %arg1, %c1_i32 : i32
    %4 = arith.extui %3 : i1 to i32
    %c0_i32_1 = arith.constant 0 : i32
    %5 = arith.cmpi ne, %4, %c0_i32_1 : i32
    scf.if %5 {
      %c0 = arith.constant 0 : index
      %c0_2 = arith.constant 0 : index
      %c0_3 = arith.constant 0 : index
      %6 = vector.load %arg3[%c0, %c0_2, %c0_3] : memref<1x32x64xbf16, #tpu.memory_space<vmem>>, vector<1x32x64xbf16>
      %7 = vector.shape_cast %6 : vector<1x32x64xbf16> to vector<32x64xbf16>
      %8 = arith.index_cast %arg2 : i32 to index
      %c0_4 = arith.constant 0 : index
      %c0_5 = arith.constant 0 : index
      %9 = vector.load %arg24[%8, %c0_4, %c0_5] : memref<1x8x64xf32, #tpu.memory_space<vmem>>, vector<1x8x64xf32>
      %10 = vector.shape_cast %9 : vector<1x8x64xf32> to vector<8x64xf32>
      %c0_6 = arith.constant 0 : index
      %c0_7 = arith.constant 0 : index
      %11 = vector.load %arg22[%c0_6, %c0_7] : memref<8x1xf32, #tpu.memory_space<vmem>>, vector<8x1xf32>
      %12 = vector.broadcast %11 : vector<8x1xf32> to vector<8x64xf32>
      %13 = arith.subf %10, %12 : vector<8x64xf32>
      %14 = math.exp %13 : vector<8x64xf32>
      %c0_8 = arith.constant 0 : index
      %c0_9 = arith.constant 0 : index
      %15 = vector.load %arg23[%c0_8, %c0_9] : memref<8x1xf32, #tpu.memory_space<vmem>>, vector<8x1xf32>
      %16 = tpu.reciprocal %15 {approx = true} : vector<8x1xf32> -> vector<8x1xf32>
      %17 = vector.broadcast %16 : vector<8x1xf32> to vector<8x64xf32>
      %18 = arith.mulf %14, %17 : vector<8x64xf32>
      %c0_10 = arith.constant 0 : index
      %c0_11 = arith.constant 0 : index
      %19 = vector.load %arg21[%c0_10, %c0_11] : memref<16x8xbf16, #tpu.memory_space<vmem>>, vector<16x8xbf16>
      %20 = arith.truncf %18 : vector<8x64xf32> to vector<8x64xbf16>
      %cst = arith.constant dense<0.000000e+00> : vector<16x64xf32>
      %21 = tpu.matmul %19, %20, %cst {dimension_numbers = #tpu.dot_dimension_numbers<[1], [0], [0], [1], [0, 0, 1, 1], [], []>} : vector<16x8xbf16>, vector<8x64xbf16>, vector<16x64xf32> -> vector<16x64xf32>
      %c0_12 = arith.constant 0 : index
      %c0_13 = arith.constant 0 : index
      %22 = vector.load %arg12[%c0_12, %c0_13] : memref<32x16xbf16, #tpu.memory_space<vmem>>, vector<32x16xbf16>
      %23 = arith.truncf %21 : vector<16x64xf32> to vector<16x64xbf16>
      %cst_14 = arith.constant dense<0.000000e+00> : vector<32x64xf32>
      %24 = tpu.matmul %22, %23, %cst_14 {dimension_numbers = #tpu.dot_dimension_numbers<[1], [0], [0], [1], [0, 0, 1, 1], [], []>} : vector<32x16xbf16>, vector<16x64xbf16>, vector<32x64xf32> -> vector<32x64xf32>
      %c0_15 = arith.constant 0 : index
      %c0_16 = arith.constant 0 : index
      %25 = vector.load %arg13[%c0_15, %c0_16] : memref<32x1xf32, #tpu.memory_space<vmem>>, vector<32x1xf32>
      %26 = vector.broadcast %25 : vector<32x1xf32> to vector<32x64xf32>
      %27 = arith.mulf %24, %26 : vector<32x64xf32>
      %c0_17 = arith.constant 0 : index
      %c0_18 = arith.constant 0 : index
      %28 = vector.load %arg14[%c0_17, %c0_18] : memref<32x1xf32, #tpu.memory_space<vmem>>, vector<32x1xf32>
      %29 = vector.broadcast %28 : vector<32x1xf32> to vector<32x64xf32>
      %30 = arith.addf %27, %29 : vector<32x64xf32>
      %cst_19 = arith.constant 0.000000e+00 : f32
      %31 = vector.broadcast %cst_19 : f32 to vector<32x64xf32>
      %32 = arith.maximumf %30, %31 : vector<32x64xf32>
      %c0_20 = arith.constant 0 : index
      %c0_21 = arith.constant 0 : index
      %33 = vector.load %arg15[%c0_20, %c0_21] : memref<32x32xbf16, #tpu.memory_space<vmem>>, vector<32x32xbf16>
      %34 = arith.truncf %32 : vector<32x64xf32> to vector<32x64xbf16>
      %cst_22 = arith.constant dense<0.000000e+00> : vector<32x64xf32>
      %35 = tpu.matmul %33, %34, %cst_22 {dimension_numbers = #tpu.dot_dimension_numbers<[1], [0], [0], [1], [0, 0, 1, 1], [], []>} : vector<32x32xbf16>, vector<32x64xbf16>, vector<32x64xf32> -> vector<32x64xf32>
      %c0_23 = arith.constant 0 : index
      %c0_24 = arith.constant 0 : index
      %36 = vector.load %arg16[%c0_23, %c0_24] : memref<32x32xbf16, #tpu.memory_space<vmem>>, vector<32x32xbf16>
      %cst_25 = arith.constant dense<0.000000e+00> : vector<32x64xf32>
      %37 = tpu.matmul %36, %7, %cst_25 {dimension_numbers = #tpu.dot_dimension_numbers<[1], [0], [0], [1], [0, 0, 1, 1], [], []>} : vector<32x32xbf16>, vector<32x64xbf16>, vector<32x64xf32> -> vector<32x64xf32>
      %38 = arith.addf %35, %37 : vector<32x64xf32>
      %c0_26 = arith.constant 0 : index
      %c0_27 = arith.constant 0 : index
      %39 = vector.load %arg17[%c0_26, %c0_27] : memref<32x1xf32, #tpu.memory_space<vmem>>, vector<32x1xf32>
      %40 = vector.broadcast %39 : vector<32x1xf32> to vector<32x64xf32>
      %41 = arith.mulf %38, %40 : vector<32x64xf32>
      %c0_28 = arith.constant 0 : index
      %c0_29 = arith.constant 0 : index
      %42 = vector.load %arg18[%c0_28, %c0_29] : memref<32x1xf32, #tpu.memory_space<vmem>>, vector<32x1xf32>
      %43 = vector.broadcast %42 : vector<32x1xf32> to vector<32x64xf32>
      %44 = arith.addf %41, %43 : vector<32x64xf32>
      %cst_30 = arith.constant 0.000000e+00 : f32
      %45 = vector.broadcast %cst_30 : f32 to vector<32x64xf32>
      %46 = arith.maximumf %44, %45 : vector<32x64xf32>
      %c0_31 = arith.constant 0 : index
      %c0_32 = arith.constant 0 : index
      %c0_33 = arith.constant 0 : index
      %47 = vector.load %arg19[%c0_31, %c0_32, %c0_33] : memref<1x32x64xf32, #tpu.memory_space<vmem>>, vector<1x32x64xf32>
      %48 = vector.shape_cast %47 : vector<1x32x64xf32> to vector<32x64xf32>
      %49 = vector.shape_cast %46 : vector<32x64xf32> to vector<1x32x64xf32>
      tpu.vector_store %arg19[%c0_31, %c0_32, %c0_33], %49 {strides = array<i32>} : memref<1x32x64xf32, #tpu.memory_space<vmem>>, vector<1x32x64xf32>,
    } else {
    }
    return
  }
  func.func @transform_0(%arg0: i32, %arg1: i32, %arg2: i32) -> (i32, i32, i32) {
    %c0_i32 = arith.constant 0 : i32
    %c0_i32_0 = arith.constant 0 : i32
    return %arg0, %c0_i32, %arg2 : i32, i32, i32
  }
  func.func @transform_1(%arg0: i32, %arg1: i32, %arg2: i32) -> (i32, i32, i32) {
    %c0_i32 = arith.constant 0 : i32
    %c0_i32_0 = arith.constant 0 : i32
    %c0_i32_1 = arith.constant 0 : i32
    return %arg0, %c0_i32, %c0_i32_0 : i32, i32, i32
  }
  func.func @transform_2(%arg0: i32, %arg1: i32, %arg2: i32) -> (i32, i32) {
    %c0_i32 = arith.constant 0 : i32
    %c0_i32_0 = arith.constant 0 : i32
    %c0_i32_1 = arith.constant 0 : i32
    return %c0_i32, %c0_i32_0 : i32, i32
  }
  func.func @transform_3(%arg0: i32, %arg1: i32, %arg2: i32) -> (i32, i32) {
    %c0_i32 = arith.constant 0 : i32
    %c0_i32_0 = arith.constant 0 : i32
    %c0_i32_1 = arith.constant 0 : i32
    return %c0_i32, %c0_i32_0 : i32, i32
  }
  func.func @transform_4(%arg0: i32, %arg1: i32, %arg2: i32) -> (i32, i32) {
    %c0_i32 = arith.constant 0 : i32
    %c0_i32_0 = arith.constant 0 : i32
    %c0_i32_1 = arith.constant 0 : i32
    return %c0_i32, %c0_i32_0 : i32, i32
  }
  func.func @transform_5(%arg0: i32, %arg1: i32, %arg2: i32) -> (i32, i32) {
    %c0_i32 = arith.constant 0 : i32
    %c0_i32_0 = arith.constant 0 : i32
    %c0_i32_1 = arith.constant 0 : i32
    return %c0_i32, %c0_i32_0 : i32, i32
  }
  func.func @transform_6(%arg0: i32, %arg1: i32, %arg2: i32) -> (i32, i32) {
    %c0_i32 = arith.constant 0 : i32
    %c0_i32_0 = arith.constant 0 : i32
    %c0_i32_1 = arith.constant 0 : i32
    return %c0_i32, %c0_i32_0 : i32, i32
  }
  func.func @transform_7(%arg0: i32, %arg1: i32, %arg2: i32) -> (i32, i32) {
    %c0_i32 = arith.constant 0 : i32
    %c0_i32_0 = arith.constant 0 : i32
    %c0_i32_1 = arith.constant 0 : i32
    return %c0_i32, %c0_i32_0 : i32, i32
  }
  func.func @transform_8(%arg0: i32, %arg1: i32, %arg2: i32) -> (i32, i32) {
    %c0_i32 = arith.constant 0 : i32
    %c0_i32_0 = arith.constant 0 : i32
    %c0_i32_1 = arith.constant 0 : i32
    return %c0_i32, %c0_i32_0 : i32, i32
  }
  func.func @transform_9(%arg0: i32, %arg1: i32, %arg2: i32) -> (i32, i32) {
    %c0_i32 = arith.constant 0 : i32
    %c0_i32_0 = arith.constant 0 : i32
    %c0_i32_1 = arith.constant 0 : i32
    return %c0_i32, %c0_i32_0 : i32, i32
  }
  func.func @transform_10(%arg0: i32, %arg1: i32, %arg2: i32) -> (i32, i32) {
    %c0_i32 = arith.constant 0 : i32
    %c0_i32_0 = arith.constant 0 : i32
    %c0_i32_1 = arith.constant 0 : i32
    return %c0_i32, %c0_i32_0 : i32, i32
  }
  func.func @transform_11(%arg0: i32, %arg1: i32, %arg2: i32) -> (i32, i32) {
    %c0_i32 = arith.constant 0 : i32
    %c0_i32_0 = arith.constant 0 : i32
    %c0_i32_1 = arith.constant 0 : i32
    return %c0_i32, %c0_i32_0 : i32, i32
  }
  func.func @transform_12(%arg0: i32, %arg1: i32, %arg2: i32) -> (i32, i32) {
    %c0_i32 = arith.constant 0 : i32
    %c0_i32_0 = arith.constant 0 : i32
    %c0_i32_1 = arith.constant 0 : i32
    return %c0_i32, %c0_i32_0 : i32, i32
  }
  func.func @transform_13(%arg0: i32, %arg1: i32, %arg2: i32) -> (i32, i32) {
    %c0_i32 = arith.constant 0 : i32
    %c0_i32_0 = arith.constant 0 : i32
    %c0_i32_1 = arith.constant 0 : i32
    return %c0_i32, %c0_i32_0 : i32, i32
  }
  func.func @transform_14(%arg0: i32, %arg1: i32, %arg2: i32) -> (i32, i32) {
    %c0_i32 = arith.constant 0 : i32
    %c0_i32_0 = arith.constant 0 : i32
    %c0_i32_1 = arith.constant 0 : i32
    return %c0_i32, %c0_i32_0 : i32, i32
  }
  func.func @transform_15(%arg0: i32, %arg1: i32, %arg2: i32) -> (i32, i32) {
    %c0_i32 = arith.constant 0 : i32
    %c0_i32_0 = arith.constant 0 : i32
    %c0_i32_1 = arith.constant 0 : i32
    return %c0_i32, %c0_i32_0 : i32, i32
  }
  func.func @transform_16(%arg0: i32, %arg1: i32, %arg2: i32) -> (i32, i32, i32) {
    %0 = arith.muli %arg1, %arg2 : i32
    %c0_i32 = arith.constant 0 : i32
    %c0_i32_0 = arith.constant 0 : i32
    return %arg0, %c0_i32, %0 : i32, i32, i32
  }
}

</mosaic_0001>

<llo_original>
// kernel: tpu_custom_call.1
$region0: #{tpu_custom_call.1}
  #allocation0 [shape = 'u32[]', space=smem, size = 0x4, offset = 0x4, fixed_abs, tag = 'smem constant byte address 0x4 - core index']
  #allocation1 [shape = 'u32[144,128]{1,0:T(1,128)}', space=vmem, size = 0x12000, scoped, tag = 'internal scratch']
  #allocation2 [shape = 'bf16[16,8]{1,0:T(16,128)(2,1)}', space=vmem, size = 0x1000, scoped, tag = 'scratch operand']
  #allocation3 [shape = 'bf16[16,8]{1,0:T(16,128)(2,1)}', space=vmem, size = 0x1000, scoped, tag = 'scratch operand']
  #allocation4 [shape = 'f32[8,1]{1,0:T(8,128)}', space=vmem, size = 0x1000, scoped, tag = 'scratch operand']
  #allocation5 [shape = 'f32[8,1]{1,0:T(8,128)}', space=vmem, size = 0x1000, scoped, tag = 'scratch operand']
  #allocation6 [shape = 'f32[1,8,64]{2,1,0:T(8,128)}', space=vmem, size = 0x1000, scoped, tag = 'scratch operand']
  %s0 = inlined_call_operand.vmem [shape: bf16[2,32,64], index: 0, kind: input, shape index: {}]
  %s1 = inlined_call_operand.vmem [shape: bf16[2,32,8], index: 1, kind: input, shape index: {}]
  %s2 = inlined_call_operand.vmem [shape: bf16[16,32], index: 2, kind: input, shape index: {}]
  %s3 = inlined_call_operand.vmem [shape: f32[16,1], index: 3, kind: input, shape index: {}]
  %s4 = inlined_call_operand.vmem [shape: f32[16,1], index: 4, kind: input, shape index: {}]
  %s5 = inlined_call_operand.vmem [shape: bf16[16,16], index: 5, kind: input, shape index: {}]
  %s6 = inlined_call_operand.vmem [shape: f32[16,1], index: 6, kind: input, shape index: {}]
  %s7 = inlined_call_operand.vmem [shape: f32[16,1], index: 7, kind: input, shape index: {}]
  %s8 = inlined_call_operand.vmem [shape: bf16[32,32], index: 8, kind: input, shape index: {}]
  %s9 = inlined_call_operand.vmem [shape: bf16[32,16], index: 9, kind: input, shape index: {}]
  %s10 = inlined_call_operand.vmem [shape: f32[32,1], index: 10, kind: input, shape index: {}]
  %s11 = inlined_call_operand.vmem [shape: f32[32,1], index: 11, kind: input, shape index: {}]
  %s12 = inlined_call_operand.vmem [shape: bf16[32,32], index: 12, kind: input, shape index: {}]
  %s13 = inlined_call_operand.vmem [shape: bf16[32,32], index: 13, kind: input, shape index: {}]
  %s14 = inlined_call_operand.vmem [shape: f32[32,1], index: 14, kind: input, shape index: {}]
  %s15 = inlined_call_operand.vmem [shape: f32[32,1], index: 15, kind: input, shape index: {}]
  %s16 = inlined_call_operand.hbm [shape: f32[2,32,64], index: 16, kind: output, shape index: {}]
  %s17 = sld [smem:[#allocation0]]
  $region109: #{tpu_custom_call.1} parent=0
    _
  %s19 = ssub.s32 1, %s17
  %s20 = scalar_select 0, %s19, %s17
  $region1: #{tpu_custom_call.1} parent=0
    #allocation7 [shape = 'u8[32768]{0}', space=vmem, size = 0x8000, scoped, tag = 'output window, operand 0']
    #allocation8 [shape = 's32[2]{0}', space=sflag, size = 0x8, scoped, tag = 'scoped memory for tpu_custom_call.1']
    %21 = vsyncpa [#allocation8], 0
    %s22 = scalar_lea.sflag [#allocation8], 1
    %23 = vsyncpa %s22, 0
    loop: start=0, step=1, limit=6
    $region2: #{tpu_custom_call.1} parent=1 // loop_pre_header
      _
    $region3: #{tpu_custom_call.1} parent=1 // loop_header
      %s25 = sphi 0, %s29
      %p26 = scmp.ge.s32.totalorder %s25, 6
      %s32 = sphi 0, %s51
      %s33 = sphi 0, %s47
      %s34 = sphi 0, %s43
      %s35 = sphi 0, %s32
      %s36 = sphi 0, %s33
      %s37 = sphi 0, %s34
      %s38 = sphi 0, %s35
      %s39 = sphi 0, %s36
      %s40 = sphi 0, %s37
      %s56 = sphi 0, %s58
      %s59 = sphi 0, %s56
      %s60 = sphi 0, %s59
      %s76 = sphi 0, %s60
      %s82 = sphi 0, %s84
      %s85 = sphi 0, %s82
      %s86 = sphi 0, %s85
      %s102 = sphi 0, %s86
      %s106 = sphi 0, %s106
      %s108 = sphi 0, %s106
      %s109 = sphi 0, %s108
      %s123 = sphi 0, %s109
      %s127 = sphi 0, %s127
      %s129 = sphi 0, %s127
      %s130 = sphi 0, %s129
      %s144 = sphi 0, %s130
      %s148 = sphi 0, %s148
      %s150 = sphi 0, %s148
      %s151 = sphi 0, %s150
      %s165 = sphi 0, %s151
      %s169 = sphi 0, %s169
      %s171 = sphi 0, %s169
      %s172 = sphi 0, %s171
      %s186 = sphi 0, %s172
      %s190 = sphi 0, %s190
      %s192 = sphi 0, %s190
      %s193 = sphi 0, %s192
      %s207 = sphi 0, %s193
      %s211 = sphi 0, %s211
      %s213 = sphi 0, %s211
      %s214 = sphi 0, %s213
      %s228 = sphi 0, %s214
      %s232 = sphi 0, %s232
      %s234 = sphi 0, %s232
      %s235 = sphi 0, %s234
      %s249 = sphi 0, %s235
      %s253 = sphi 0, %s253
      %s255 = sphi 0, %s253
      %s256 = sphi 0, %s255
      %s270 = sphi 0, %s256
      %s274 = sphi 0, %s274
      %s276 = sphi 0, %s274
      %s277 = sphi 0, %s276
      %s291 = sphi 0, %s277
      %s295 = sphi 0, %s295
      %s297 = sphi 0, %s295
      %s298 = sphi 0, %s297
      %s312 = sphi 0, %s298
      %s316 = sphi 0, %s316
      %s318 = sphi 0, %s316
      %s319 = sphi 0, %s318
      %s333 = sphi 0, %s319
      %s337 = sphi 0, %s337
      %s339 = sphi 0, %s337
      %s340 = sphi 0, %s339
      %s354 = sphi 0, %s340
      %s358 = sphi 0, %s358
      %s360 = sphi 0, %s358
      %s361 = sphi 0, %s360
      %s375 = sphi 0, %s361
      %s379 = sphi 0, %s379
      %s381 = sphi 0, %s379
      %s382 = sphi 0, %s381
      %s396 = sphi 0, %s382
      %s406 = sphi 0, %s408
      %s409 = sphi 0, %s406
      %s410 = sphi 0, %s409
      %s426 = sphi 0, %s410
    $region4: #{tpu_custom_call.1} parent=1 // loop_header_branch
      %28 = sbr.rel (%p26) target = $region8
    $region5: #{tpu_custom_call.1} parent=1 // loop_body
      %s30 = ssub.s32 %s25, 1
      %s31 = ssub.s32 %s25, 2
      %s41 = sadd.s32 1, %s34
      %p42 = scmp.ge.s32.totalorder %s41, 1
      %s43 = scalar_select %p42, 0, %s41
      %s44 = sadd.s32 1, %s33
      %s45 = scalar_select %p42, %s44, %s33
      %p46 = scmp.ge.s32.totalorder %s45, 2
      %s47 = scalar_select %p46, 0, %s45
      %s48 = sadd.s32 1, %s32
      %s49 = scalar_select %p46, %s48, %s32
      %p50 = scmp.ge.s32.totalorder %s49, 2
      %s51 = scalar_select %p50, 0, %s49
      %s52 = ssub.s32 %s32, %s51
      %s53 = ssub.s32 %s34, %s43
      %s54 = sor.u32 %s52, %s53
      %p55 = scmp.eq.s32.totalorder %s54, 0
      %s57 = sadd.s32 %s56, 1
      %s58 = scalar_select %p55, %s56, %s57
      %p61 = pneg %p55
      %p62 = scmp.eq.s32.totalorder %s25, 3
      %p63 = por %p61, %p62
      %p64 = scmp.ne.s32.totalorder %s56, %s59
      %p65 = scmp.eq.s32.totalorder %s25, 0
      %p66 = por %p64, %p65
      %p67 = scmp.ne.s32.totalorder %s56, %s59
      %p68 = scmp.eq.s32.totalorder %s30, 3
      %p69 = por %p67, %p68
      %p70 = scmp.ne.s32.totalorder %s59, %s60
      %p71 = scmp.eq.s32.totalorder %s30, 0
      %p72 = por %p70, %p71
      %p73 = scmp.ne.s32.totalorder %s59, %s60
      %p74 = scmp.eq.s32.totalorder %s31, 3
      %p75 = por %p73, %p74
      %p77 = scmp.ne.s32.totalorder %s60, %s76
      %p78 = scmp.eq.s32.totalorder %s31, 0
      %p79 = por %p77, %p78
      %s80 = ssub.s32 %s32, %s51
      %p81 = scmp.eq.s32.totalorder %s80, 0
      %s83 = sadd.s32 %s82, 1
      %s84 = scalar_select %p81, %s82, %s83
      %p87 = pneg %p81
      %p88 = scmp.eq.s32.totalorder %s25, 3
      %p89 = por %p87, %p88
      %p90 = scmp.ne.s32.totalorder %s82, %s85
      %p91 = scmp.eq.s32.totalorder %s25, 0
      %p92 = por %p90, %p91
      %p93 = scmp.ne.s32.totalorder %s82, %s85
      %p94 = scmp.eq.s32.totalorder %s30, 3
      %p95 = por %p93, %p94
      %p96 = scmp.ne.s32.totalorder %s85, %s86
      %p97 = scmp.eq.s32.totalorder %s30, 0
      %p98 = por %p96, %p97
      %p99 = scmp.ne.s32.totalorder %s85, %s86
      %p100 = scmp.eq.s32.totalorder %s31, 3
      %p101 = por %p99, %p100
      %p103 = scmp.ne.s32.totalorder %s86, %s102
      %p104 = scmp.eq.s32.totalorder %s31, 0
      %p105 = por %p103, %p104
      %s107 = sadd.s32 %s106, 1
      %p110 = scmp.eq.s32.totalorder %s25, 3
      %p111 = scmp.ne.s32.totalorder %s106, %s108
      %p112 = scmp.eq.s32.totalorder %s25, 0
      %p113 = por %p111, %p112
      %p114 = scmp.ne.s32.totalorder %s106, %s108
      %p115 = scmp.eq.s32.totalorder %s30, 3
      %p116 = por %p114, %p115
      %p117 = scmp.ne.s32.totalorder %s108, %s109
      %p118 = scmp.eq.s32.totalorder %s30, 0
      %p119 = por %p117, %p118
      %p120 = scmp.ne.s32.totalorder %s108, %s109
      %p121 = scmp.eq.s32.totalorder %s31, 3
      %p122 = por %p120, %p121
      %p124 = scmp.ne.s32.totalorder %s109, %s123
      %p125 = scmp.eq.s32.totalorder %s31, 0
      %p126 = por %p124, %p125
      %s128 = sadd.s32 %s127, 1
      %p131 = scmp.eq.s32.totalorder %s25, 3
      %p132 = scmp.ne.s32.totalorder %s127, %s129
      %p133 = scmp.eq.s32.totalorder %s25, 0
      %p134 = por %p132, %p133
      %p135 = scmp.ne.s32.totalorder %s127, %s129
      %p136 = scmp.eq.s32.totalorder %s30, 3
      %p137 = por %p135, %p136
      %p138 = scmp.ne.s32.totalorder %s129, %s130
      %p139 = scmp.eq.s32.totalorder %s30, 0
      %p140 = por %p138, %p139
      %p141 = scmp.ne.s32.totalorder %s129, %s130
      %p142 = scmp.eq.s32.totalorder %s31, 3
      %p143 = por %p141, %p142
      %p145 = scmp.ne.s32.totalorder %s130, %s144
      %p146 = scmp.eq.s32.totalorder %s31, 0
      %p147 = por %p145, %p146
      %s149 = sadd.s32 %s148, 1
      %p152 = scmp.eq.s32.totalorder %s25, 3
      %p153 = scmp.ne.s32.totalorder %s148, %s150
      %p154 = scmp.eq.s32.totalorder %s25, 0
      %p155 = por %p153, %p154
      %p156 = scmp.ne.s32.totalorder %s148, %s150
      %p157 = scmp.eq.s32.totalorder %s30, 3
      %p158 = por %p156, %p157
      %p159 = scmp.ne.s32.totalorder %s150, %s151
      %p160 = scmp.eq.s32.totalorder %s30, 0
      %p161 = por %p159, %p160
      %p162 = scmp.ne.s32.totalorder %s150, %s151
      %p163 = scmp.eq.s32.totalorder %s31, 3
      %p164 = por %p162, %p163
      %p166 = scmp.ne.s32.totalorder %s151, %s165
      %p167 = scmp.eq.s32.totalorder %s31, 0
      %p168 = por %p166, %p167
      %s170 = sadd.s32 %s169, 1
      %p173 = scmp.eq.s32.totalorder %s25, 3
      %p174 = scmp.ne.s32.totalorder %s169, %s171
      %p175 = scmp.eq.s32.totalorder %s25, 0
      %p176 = por %p174, %p175
      %p177 = scmp.ne.s32.totalorder %s169, %s171
      %p178 = scmp.eq.s32.totalorder %s30, 3
      %p179 = por %p177, %p178
      %p180 = scmp.ne.s32.totalorder %s171, %s172
      %p181 = scmp.eq.s32.totalorder %s30, 0
      %p182 = por %p180, %p181
      %p183 = scmp.ne.s32.totalorder %s171, %s172
      %p184 = scmp.eq.s32.totalorder %s31, 3
      %p185 = por %p183, %p184
      %p187 = scmp.ne.s32.totalorder %s172, %s186
      %p188 = scmp.eq.s32.totalorder %s31, 0
      %p189 = por %p187, %p188
      %s191 = sadd.s32 %s190, 1
      %p194 = scmp.eq.s32.totalorder %s25, 3
      %p195 = scmp.ne.s32.totalorder %s190, %s192
      %p196 = scmp.eq.s32.totalorder %s25, 0
      %p197 = por %p195, %p196
      %p198 = scmp.ne.s32.totalorder %s190, %s192
      %p199 = scmp.eq.s32.totalorder %s30, 3
      %p200 = por %p198, %p199
      %p201 = scmp.ne.s32.totalorder %s192, %s193
      %p202 = scmp.eq.s32.totalorder %s30, 0
      %p203 = por %p201, %p202
      %p204 = scmp.ne.s32.totalorder %s192, %s193
      %p205 = scmp.eq.s32.totalorder %s31, 3
      %p206 = por %p204, %p205
      %p208 = scmp.ne.s32.totalorder %s193, %s207
      %p209 = scmp.eq.s32.totalorder %s31, 0
      %p210 = por %p208, %p209
      %s212 = sadd.s32 %s211, 1
      %p215 = scmp.eq.s32.totalorder %s25, 3
      %p216 = scmp.ne.s32.totalorder %s211, %s213
      %p217 = scmp.eq.s32.totalorder %s25, 0
      %p218 = por %p216, %p217
      %p219 = scmp.ne.s32.totalorder %s211, %s213
      %p220 = scmp.eq.s32.totalorder %s30, 3
      %p221 = por %p219, %p220
      %p222 = scmp.ne.s32.totalorder %s213, %s214
      %p223 = scmp.eq.s32.totalorder %s30, 0
      %p224 = por %p222, %p223
      %p225 = scmp.ne.s32.totalorder %s213, %s214
      %p226 = scmp.eq.s32.totalorder %s31, 3
      %p227 = por %p225, %p226
      %p229 = scmp.ne.s32.totalorder %s214, %s228
      %p230 = scmp.eq.s32.totalorder %s31, 0
      %p231 = por %p229, %p230
      %s233 = sadd.s32 %s232, 1
      %p236 = scmp.eq.s32.totalorder %s25, 3
      %p237 = scmp.ne.s32.totalorder %s232, %s234
      %p238 = scmp.eq.s32.totalorder %s25, 0
      %p239 = por %p237, %p238
      %p240 = scmp.ne.s32.totalorder %s232, %s234
      %p241 = scmp.eq.s32.totalorder %s30, 3
      %p242 = por %p240, %p241
      %p243 = scmp.ne.s32.totalorder %s234, %s235
      %p244 = scmp.eq.s32.totalorder %s30, 0
      %p245 = por %p243, %p244
      %p246 = scmp.ne.s32.totalorder %s234, %s235
      %p247 = scmp.eq.s32.totalorder %s31, 3
      %p248 = por %p246, %p247
      %p250 = scmp.ne.s32.totalorder %s235, %s249
      %p251 = scmp.eq.s32.totalorder %s31, 0
      %p252 = por %p250, %p251
      %s254 = sadd.s32 %s253, 1
      %p257 = scmp.eq.s32.totalorder %s25, 3
      %p258 = scmp.ne.s32.totalorder %s253, %s255
      %p259 = scmp.eq.s32.totalorder %s25, 0
      %p260 = por %p258, %p259
      %p261 = scmp.ne.s32.totalorder %s253, %s255
      %p262 = scmp.eq.s32.totalorder %s30, 3
      %p263 = por %p261, %p262
      %p264 = scmp.ne.s32.totalorder %s255, %s256
      %p265 = scmp.eq.s32.totalorder %s30, 0
      %p266 = por %p264, %p265
      %p267 = scmp.ne.s32.totalorder %s255, %s256
      %p268 = scmp.eq.s32.totalorder %s31, 3
      %p269 = por %p267, %p268
      %p271 = scmp.ne.s32.totalorder %s256, %s270
      %p272 = scmp.eq.s32.totalorder %s31, 0
      %p273 = por %p271, %p272
      %s275 = sadd.s32 %s274, 1
      %p278 = scmp.eq.s32.totalorder %s25, 3
      %p279 = scmp.ne.s32.totalorder %s274, %s276
      %p280 = scmp.eq.s32.totalorder %s25, 0
      %p281 = por %p279, %p280
      %p282 = scmp.ne.s32.totalorder %s274, %s276
      %p283 = scmp.eq.s32.totalorder %s30, 3
      %p284 = por %p282, %p283
      %p285 = scmp.ne.s32.totalorder %s276, %s277
      %p286 = scmp.eq.s32.totalorder %s30, 0
      %p287 = por %p285, %p286
      %p288 = scmp.ne.s32.totalorder %s276, %s277
      %p289 = scmp.eq.s32.totalorder %s31, 3
      %p290 = por %p288, %p289
      %p292 = scmp.ne.s32.totalorder %s277, %s291
      %p293 = scmp.eq.s32.totalorder %s31, 0
      %p294 = por %p292, %p293
      %s296 = sadd.s32 %s295, 1
      %p299 = scmp.eq.s32.totalorder %s25, 3
      %p300 = scmp.ne.s32.totalorder %s295, %s297
      %p301 = scmp.eq.s32.totalorder %s25, 0
      %p302 = por %p300, %p301
      %p303 = scmp.ne.s32.totalorder %s295, %s297
      %p304 = scmp.eq.s32.totalorder %s30, 3
      %p305 = por %p303, %p304
      %p306 = scmp.ne.s32.totalorder %s297, %s298
      %p307 = scmp.eq.s32.totalorder %s30, 0
      %p308 = por %p306, %p307
      %p309 = scmp.ne.s32.totalorder %s297, %s298
      %p310 = scmp.eq.s32.totalorder %s31, 3
      %p311 = por %p309, %p310
      %p313 = scmp.ne.s32.totalorder %s298, %s312
      %p314 = scmp.eq.s32.totalorder %s31, 0
      %p315 = por %p313, %p314
      %s317 = sadd.s32 %s316, 1
      %p320 = scmp.eq.s32.totalorder %s25, 3
      %p321 = scmp.ne.s32.totalorder %s316, %s318
      %p322 = scmp.eq.s32.totalorder %s25, 0
      %p323 = por %p321, %p322
      %p324 = scmp.ne.s32.totalorder %s316, %s318
      %p325 = scmp.eq.s32.totalorder %s30, 3
      %p326 = por %p324, %p325
      %p327 = scmp.ne.s32.totalorder %s318, %s319
      %p328 = scmp.eq.s32.totalorder %s30, 0
      %p329 = por %p327, %p328
      %p330 = scmp.ne.s32.totalorder %s318, %s319
      %p331 = scmp.eq.s32.totalorder %s31, 3
      %p332 = por %p330, %p331
      %p334 = scmp.ne.s32.totalorder %s319, %s333
      %p335 = scmp.eq.s32.totalorder %s31, 0
      %p336 = por %p334, %p335
      %s338 = sadd.s32 %s337, 1
      %p341 = scmp.eq.s32.totalorder %s25, 3
      %p342 = scmp.ne.s32.totalorder %s337, %s339
      %p343 = scmp.eq.s32.totalorder %s25, 0
      %p344 = por %p342, %p343
      %p345 = scmp.ne.s32.totalorder %s337, %s339
      %p346 = scmp.eq.s32.totalorder %s30, 3
      %p347 = por %p345, %p346
      %p348 = scmp.ne.s32.totalorder %s339, %s340
      %p349 = scmp.eq.s32.totalorder %s30, 0
      %p350 = por %p348, %p349
      %p351 = scmp.ne.s32.totalorder %s339, %s340
      %p352 = scmp.eq.s32.totalorder %s31, 3
      %p353 = por %p351, %p352
      %p355 = scmp.ne.s32.totalorder %s340, %s354
      %p356 = scmp.eq.s32.totalorder %s31, 0
      %p357 = por %p355, %p356
      %s359 = sadd.s32 %s358, 1
      %p362 = scmp.eq.s32.totalorder %s25, 3
      %p363 = scmp.ne.s32.totalorder %s358, %s360
      %p364 = scmp.eq.s32.totalorder %s25, 0
      %p365 = por %p363, %p364
      %p366 = scmp.ne.s32.totalorder %s358, %s360
      %p367 = scmp.eq.s32.totalorder %s30, 3
      %p368 = por %p366, %p367
      %p369 = scmp.ne.s32.totalorder %s360, %s361
      %p370 = scmp.eq.s32.totalorder %s30, 0
      %p371 = por %p369, %p370
      %p372 = scmp.ne.s32.totalorder %s360, %s361
      %p373 = scmp.eq.s32.totalorder %s31, 3
      %p374 = por %p372, %p373
      %p376 = scmp.ne.s32.totalorder %s361, %s375
      %p377 = scmp.eq.s32.totalorder %s31, 0
      %p378 = por %p376, %p377
      %s380 = sadd.s32 %s379, 1
      %p383 = scmp.eq.s32.totalorder %s25, 3
      %p384 = scmp.ne.s32.totalorder %s379, %s381
      %p385 = scmp.eq.s32.totalorder %s25, 0
      %p386 = por %p384, %p385
      %p387 = scmp.ne.s32.totalorder %s379, %s381
      %p388 = scmp.eq.s32.totalorder %s30, 3
      %p389 = por %p387, %p388
      %p390 = scmp.ne.s32.totalorder %s381, %s382
      %p391 = scmp.eq.s32.totalorder %s30, 0
      %p392 = por %p390, %p391
      %p393 = scmp.ne.s32.totalorder %s381, %s382
      %p394 = scmp.eq.s32.totalorder %s31, 3
      %p395 = por %p393, %p394
      %p397 = scmp.ne.s32.totalorder %s382, %s396
      %p398 = scmp.eq.s32.totalorder %s31, 0
      %p399 = por %p397, %p398
      %s400 = smul.u32 %s33, %s34
      %s401 = smul.u32 %s47, %s43
      %s402 = ssub.s32 %s32, %s51
      %s403 = ssub.s32 %s400, %s401
      %s404 = sor.u32 %s402, %s403
      %p405 = scmp.eq.s32.totalorder %s404, 0
      %s407 = sadd.s32 %s406, 1
      %s408 = scalar_select %p405, %s406, %s407
      %p411 = pneg %p405
      %p412 = scmp.eq.s32.totalorder %s25, 3
      %p413 = por %p411, %p412
      %p414 = scmp.ne.s32.totalorder %s406, %s409
      %p415 = scmp.eq.s32.totalorder %s25, 0
      %p416 = por %p414, %p415
      %p417 = scmp.ne.s32.totalorder %s406, %s409
      %p418 = scmp.eq.s32.totalorder %s30, 3
      %p419 = por %p417, %p418
      %p420 = scmp.ne.s32.totalorder %s409, %s410
      %p421 = scmp.eq.s32.totalorder %s30, 0
      %p422 = por %p420, %p421
      %p423 = scmp.ne.s32.totalorder %s409, %s410
      %p424 = scmp.eq.s32.totalorder %s31, 3
      %p425 = por %p423, %p424
      %p427 = scmp.ne.s32.totalorder %s410, %s426
      %p428 = scmp.eq.s32.totalorder %s31, 0
      %p429 = por %p427, %p428
      %p430 = scmp.le.s32.totalorder 1, %s25
      %p431 = scmp.lt.s32.totalorder %s25, 5
      %p432 = pnand %p430, %p431
      %p433 = pneg %p432
      // Predicated region
      $region9: #{tpu_custom_call.1} parent=5 // pred_check
        _
      $region10: #{tpu_custom_call.1} parent=5 // pred_check_branch
        %435 = sbr.rel (%p432) target = $region12
      $region11: #{tpu_custom_call.1} parent=5 // pred_region
        %s436 = ssub.s32 %s25, 1
        // Predicated region
        $region13: #{tpu_custom_call.1} parent=11 // pred_check
          %p437 = pneg %p119
        $region14: #{tpu_custom_call.1} parent=11 // pred_check_branch
          %439 = sbr.rel (%p437) target = $region16
        $region15: #{tpu_custom_call.1} parent=11 // pred_region
          _
        $region16: #{tpu_custom_call.1} parent=11 // pred_fallthru
          _
        // Predicated region
        $region17: #{tpu_custom_call.1} parent=11 // pred_check
          %p440 = pneg %p140
        $region18: #{tpu_custom_call.1} parent=11 // pred_check_branch
          %442 = sbr.rel (%p440) target = $region20
        $region19: #{tpu_custom_call.1} parent=11 // pred_region
          _
        $region20: #{tpu_custom_call.1} parent=11 // pred_fallthru
          _
        // Predicated region
        $region21: #{tpu_custom_call.1} parent=11 // pred_check
          %p443 = pneg %p161
        $region22: #{tpu_custom_call.1} parent=11 // pred_check_branch
          %445 = sbr.rel (%p443) target = $region24
        $region23: #{tpu_custom_call.1} parent=11 // pred_region
          _
        $region24: #{tpu_custom_call.1} parent=11 // pred_fallthru
          _
        // Predicated region
        $region25: #{tpu_custom_call.1} parent=11 // pred_check
          %p446 = pneg %p182
        $region26: #{tpu_custom_call.1} parent=11 // pred_check_branch
          %448 = sbr.rel (%p446) target = $region28
        $region27: #{tpu_custom_call.1} parent=11 // pred_region
          _
        $region28: #{tpu_custom_call.1} parent=11 // pred_fallthru
          _
        // Predicated region
        $region29: #{tpu_custom_call.1} parent=11 // pred_check
          %p449 = pneg %p203
        $region30: #{tpu_custom_call.1} parent=11 // pred_check_branch
          %451 = sbr.rel (%p449) target = $region32
        $region31: #{tpu_custom_call.1} parent=11 // pred_region
          _
        $region32: #{tpu_custom_call.1} parent=11 // pred_fallthru
          _
        // Predicated region
        $region33: #{tpu_custom_call.1} parent=11 // pred_check
          %p452 = pneg %p224
        $region34: #{tpu_custom_call.1} parent=11 // pred_check_branch
          %454 = sbr.rel (%p452) target = $region36
        $region35: #{tpu_custom_call.1} parent=11 // pred_region
          _
        $region36: #{tpu_custom_call.1} parent=11 // pred_fallthru
          _
        // Predicated region
        $region37: #{tpu_custom_call.1} parent=11 // pred_check
          %p455 = pneg %p245
        $region38: #{tpu_custom_call.1} parent=11 // pred_check_branch
          %457 = sbr.rel (%p455) target = $region40
        $region39: #{tpu_custom_call.1} parent=11 // pred_region
          _
        $region40: #{tpu_custom_call.1} parent=11 // pred_fallthru
          _
        // Predicated region
        $region41: #{tpu_custom_call.1} parent=11 // pred_check
          %p458 = pneg %p266
        $region42: #{tpu_custom_call.1} parent=11 // pred_check_branch
          %460 = sbr.rel (%p458) target = $region44
        $region43: #{tpu_custom_call.1} parent=11 // pred_region
          _
        $region44: #{tpu_custom_call.1} parent=11 // pred_fallthru
          _
        // Predicated region
        $region45: #{tpu_custom_call.1} parent=11 // pred_check
          %p461 = pneg %p287
        $region46: #{tpu_custom_call.1} parent=11 // pred_check_branch
          %463 = sbr.rel (%p461) target = $region48
        $region47: #{tpu_custom_call.1} parent=11 // pred_region
          _
        $region48: #{tpu_custom_call.1} parent=11 // pred_fallthru
          _
        // Predicated region
        $region49: #{tpu_custom_call.1} parent=11 // pred_check
          %p464 = pneg %p308
        $region50: #{tpu_custom_call.1} parent=11 // pred_check_branch
          %466 = sbr.rel (%p464) target = $region52
        $region51: #{tpu_custom_call.1} parent=11 // pred_region
          _
        $region52: #{tpu_custom_call.1} parent=11 // pred_fallthru
          _
        // Predicated region
        $region53: #{tpu_custom_call.1} parent=11 // pred_check
          %p467 = pneg %p329
        $region54: #{tpu_custom_call.1} parent=11 // pred_check_branch
          %469 = sbr.rel (%p467) target = $region56
        $region55: #{tpu_custom_call.1} parent=11 // pred_region
          _
        $region56: #{tpu_custom_call.1} parent=11 // pred_fallthru
          _
        // Predicated region
        $region57: #{tpu_custom_call.1} parent=11 // pred_check
          %p470 = pneg %p350
        $region58: #{tpu_custom_call.1} parent=11 // pred_check_branch
          %472 = sbr.rel (%p470) target = $region60
        $region59: #{tpu_custom_call.1} parent=11 // pred_region
          _
        $region60: #{tpu_custom_call.1} parent=11 // pred_fallthru
          _
        // Predicated region
        $region61: #{tpu_custom_call.1} parent=11 // pred_check
          %p473 = pneg %p371
        $region62: #{tpu_custom_call.1} parent=11 // pred_check_branch
          %475 = sbr.rel (%p473) target = $region64
        $region63: #{tpu_custom_call.1} parent=11 // pred_region
          _
        $region64: #{tpu_custom_call.1} parent=11 // pred_fallthru
          _
        // Predicated region
        $region65: #{tpu_custom_call.1} parent=11 // pred_check
          %p476 = pneg %p392
        $region66: #{tpu_custom_call.1} parent=11 // pred_check_branch
          %478 = sbr.rel (%p476) target = $region68
        $region67: #{tpu_custom_call.1} parent=11 // pred_region
          _
        $region68: #{tpu_custom_call.1} parent=11 // pred_fallthru
          _
      $region12: #{tpu_custom_call.1} parent=5 // pred_fallthru
        _
      %p479 = scmp.lt.s32.totalorder %s25, 4
      // Predicated region
      $region69: #{tpu_custom_call.1} parent=5 // pred_check
        %p480 = pneg %p479
      $region70: #{tpu_custom_call.1} parent=5 // pred_check_branch
        %482 = sbr.rel (%p480) target = $region72
      $region71: #{tpu_custom_call.1} parent=5 // pred_region
        // Predicated region
        $region73: #{tpu_custom_call.1} parent=71 // pred_check
          %p483 = pneg %p66
        $region74: #{tpu_custom_call.1} parent=71 // pred_check_branch
          %485 = sbr.rel (%p483) target = $region76
        $region75: #{tpu_custom_call.1} parent=71 // pred_region
          %p486 = scmp.lt.s32.totalorder %s32, 1
          %s487 = scalar_select %p486, %s32, 1
          %p488 = scmp.lt.s32.totalorder %s34, 0
          %s489 = scalar_select %p488, %s34, 0
          %s490 = smul.addr %s487, 4
          %s491 = sadd.s32 %s489, %s490
          %s492 = smul.addr %s491, 4
          %s493 = scalar_lea.vmem %s0, %s492
        $region76: #{tpu_custom_call.1} parent=71 // pred_fallthru
          _
        // Predicated region
        $region77: #{tpu_custom_call.1} parent=71 // pred_check
          %p494 = pneg %p92
        $region78: #{tpu_custom_call.1} parent=71 // pred_check_branch
          %496 = sbr.rel (%p494) target = $region80
        $region79: #{tpu_custom_call.1} parent=71 // pred_region
          %p497 = scmp.lt.s32.totalorder %s32, 1
          %s498 = scalar_select %p497, %s32, 1
          %s499 = smul.addr %s498, 4
          %s500 = smul.addr %s499, 4
          %s501 = scalar_lea.vmem %s1, %s500
        $region80: #{tpu_custom_call.1} parent=71 // pred_fallthru
          _
      $region72: #{tpu_custom_call.1} parent=5 // pred_fallthru
        _
      %p502 = scmp.le.s32.totalorder 1, %s25
      %p503 = scmp.lt.s32.totalorder %s25, 5
      %p504 = pnand %p502, %p503
      %p505 = pneg %p504
      // Predicated region
      $region81: #{tpu_custom_call.1} parent=5 // pred_check
        _
      $region82: #{tpu_custom_call.1} parent=5 // pred_check_branch
        %507 = sbr.rel (%p504) target = $region84
      $region83: #{tpu_custom_call.1} parent=5 // pred_region
        %s508 = ssub.s32 %s25, 1
        %p509 = scmp.lt.s32.totalorder %s35, 1
        %s510 = scalar_select %p509, %s35, 1
        %p511 = scmp.lt.s32.totalorder %s37, 0
        %s512 = scalar_select %p511, %s37, 0
        %s513 = smul.addr %s510, 4
        %s514 = sadd.s32 %s512, %s513
        %s515 = smul.addr %s514, 4
        %s516 = scalar_lea.vmem %s0, %s515
        %p517 = pneg %p72
        %p518 = pneg %p69
        %p519 = scmp.lt.s32.totalorder %s35, 1
        %s520 = scalar_select %p519, %s35, 1
        %s521 = smul.addr %s520, 4
        %s522 = smul.addr %s521, 4
        %s523 = scalar_lea.vmem %s1, %s522
        %p524 = pneg %p98
        %p525 = pneg %p95
        %p526 = pneg %p119
        %p527 = pneg %p116
        %p528 = pneg %p140
        %p529 = pneg %p137
        %p530 = pneg %p161
        %p531 = pneg %p158
        %p532 = pneg %p182
        %p533 = pneg %p179
        %p534 = pneg %p203
        %p535 = pneg %p200
        %p536 = pneg %p224
        %p537 = pneg %p221
        %p538 = pneg %p245
        %p539 = pneg %p242
        %p540 = pneg %p266
        %p541 = pneg %p263
        %p542 = pneg %p287
        %p543 = pneg %p284
        %p544 = pneg %p308
        %p545 = pneg %p305
        %p546 = pneg %p329
        %p547 = pneg %p326
        %p548 = pneg %p350
        %p549 = pneg %p347
        %p550 = pneg %p371
        %p551 = pneg %p368
        %p552 = pneg %p392
        %p553 = pneg %p389
        %p554 = pneg %p422
        %p555 = pneg %p419
        %s556 = sand.u32 %s409, 1
        %s557 = scalar_lea.sflag [#allocation8], %s556
        %s558 = sand.u32 %s409, 1
        %s559 = smul.addr %s558, 32
        %s560 = scalar_lea.vmem [#allocation7], %s559
        %p561 = scmp.lt.s32.totalorder %s35, 1
        %s562 = scalar_select %p561, %s35, 1
        %p563 = scmp.lt.s32.totalorder %s37, 0
        %s564 = scalar_select %p563, %s37, 0
        %s565 = smul.addr %s562, 4
        %s566 = sadd.s32 %s564, %s565
        %s567 = smul.addr %s566, 4
        %s568 = scalar_lea.vmem %s0, %s567
        %p569 = scmp.lt.s32.totalorder %s35, 1
        %s570 = scalar_select %p569, %s35, 1
        %s571 = smul.addr %s570, 4
        %s572 = smul.addr %s571, 4
        %s573 = scalar_lea.vmem %s1, %s572
        %s574 = smul.u32 %s36, %s37
        %p576 = scmp.eq.s32.totalorder %s36, 0
        // Predicated region
        $region85: #{tpu_custom_call.1} parent=83 // pred_check
          %p577 = pneg %p576
        $region86: #{tpu_custom_call.1} parent=83 // pred_check_branch
          %579 = sbr.rel (%p577) target = $region88
        $region87: #{tpu_custom_call.1} parent=83 // pred_region
          %p580 = scmp.eq.s32.totalorder %s37, 0
          // Predicated region
          $region89: #{tpu_custom_call.1} parent=87 // pred_check
            %p581 = pneg %p580
          $region90: #{tpu_custom_call.1} parent=87 // pred_check_branch
            %583 = sbr.rel (%p581) target = $region92
          $region91: #{tpu_custom_call.1} parent=87 // pred_region
            %v584 = vld [vmem:[%s8] sm:$0xf]
            %v585 = vld [vmem:[%s8 + $0x4] sm:$0xf]
            %v586 = vld [vmem:[%s8 + $0x8] sm:$0xf]
            %v587 = vld [vmem:[%s8 + $0xc] sm:$0xf]
            %v588 = vld [vmem:[%s573] sm:$0xf]
            %v589 = vld [vmem:[%s573 + $0x4] sm:$0xf]
            %v590 = vld [vmem:[%s573 + $0x8] sm:$0xf]
            %v591 = vld [vmem:[%s573 + $0xc] sm:$0xf]
            %v596 = vunpack.c.l.b16 %v584
            %v597 = vunpack.c.l.b16 %v585
            %v598 = vunpack.c.l.b16 %v586
            %v599 = vunpack.c.l.b16 %v587
            %v600 = vpack.c.b16 %v597, %v596
            %v601 = vpack.c.b16 %v599, %v598
            %v606 = vunpack.c.l.b16 %v588
            %v607 = vunpack.c.l.b16 %v589
            %v608 = vunpack.c.l.b16 %v590
            %v609 = vunpack.c.l.b16 %v591
            %v610 = vpack.c.b16 %v607, %v606
            %v611 = vpack.c.b16 %v609, %v608
            %vm614 = vcmask 261120
            %v616 = vsel %vm614, %v600, 0
            %v619 = vsel %vm614, %v601, 0
            %621 = vmatprep.subr.bf16.mxu0 0
            %622 = vmatpush1.bf16.msra.mxu0 %v610
            %623 = vmatprep.subr.bf16.mxu0 0
            %624 = vmatpush1.bf16.msra.mxu0 %v611
            %625 = vmatprep.subr.bf16.mxu0 0
            %626 = vmatpush1.bf16.msra.mxu0 0
            %627 = vmatprep.subr.bf16.mxu0 0
            %628 = vmatpush1.bf16.msra.mxu0 0
            %629 = vmatprep.subr.bf16.mxu0 0
            %630 = vmatpush1.bf16.msra.mxu0 0
            %631 = vmatprep.subr.bf16.mxu0 0
            %632 = vmatpush1.bf16.msra.mxu0 0
            %633 = vmatprep.subr.bf16.mxu0 0
            %634 = vmatpush1.bf16.msra.mxu0 0
            %635 = vmatprep.subr.bf16.mxu0 0
            %636 = vmatpush1.bf16.msra.mxu0 0
            %637 = vmatprep.subr.bf16.mxu0 0
            %638 = vmatpush1.bf16.msra.mxu0 0
            %639 = vmatprep.subr.bf16.mxu0 0
            %640 = vmatpush1.bf16.msra.mxu0 0
            %641 = vmatprep.subr.bf16.mxu0 0
            %642 = vmatpush1.bf16.msra.mxu0 0
            %643 = vmatprep.subr.bf16.mxu0 0
            %644 = vmatpush1.bf16.msra.mxu0 0
            %645 = vmatprep.subr.bf16.mxu0 0
            %646 = vmatpush1.bf16.msra.mxu0 0
            %647 = vmatprep.subr.bf16.mxu0 0
            %648 = vmatpush1.bf16.msra.mxu0 0
            %649 = vmatprep.subr.bf16.mxu0 0
            %650 = vmatpush1.bf16.msra.mxu0 0
            %651 = vmatprep.subr.bf16.mxu0 0
            %652 = vmatpush1.bf16.msra.mxu0 0
            %653 = vmatprep.mubr.bf16.mxu0 0
            %654 = vmatmul.mubr.bf16.gmra.mrb[0].mxu0 %v616
            %v655 = vpop.f32.mrb[0].mxu0
            %v656 = vadd.f32 0.0, %v655
            %v657 = vpop.f32.mrb[0].mxu0
            %v658 = vpop.f32.mrb[0].mxu0
            %v659 = vadd.f32 0.0, %v658
            %v660 = vpop.f32.mrb[0].mxu0
            %661 = vmatprep.mubr.bf16.mxu0 0
            %662 = vmatmul.mubr.bf16.gmra.mrb[0].mxu0 %v619
            %v663 = vpop.f32.mrb[0].mxu0
            %v664 = vadd.f32 0.0, %v663
            %v665 = vpop.f32.mrb[0].mxu0
            %v666 = vpop.f32.mrb[0].mxu0
            %v667 = vadd.f32 0.0, %v666
            %v668 = vpop.f32.mrb[0].mxu0
            %669 = vdwg.mxu0
            %v670 = vpack.c.bf16 %v659, %v656
            %vm671 = vcmask 64512
            %672 = vst.msk [vmem:[#allocation2] sm:$0xff] %vm671, %v670
            %v673 = vpack.c.bf16 %v667, %v664
            %674 = vst.msk [vmem:[#allocation3] sm:$0xff] %vm671, %v673
            %vm675 = vcmask 7168
            %676 = vst.msk [vmem:[#allocation4] sm:$0xff] %vm675, -inf
            %677 = vst.msk [vmem:[#allocation5] sm:$0xff] %vm675, 0.0
          $region92: #{tpu_custom_call.1} parent=87 // pred_fallthru
            _
          %v678 = vld [vmem:[%s568] sm:$0xf]
          %v679 = vld [vmem:[%s568 + $0x4] sm:$0xf]
          %v680 = vld [vmem:[%s568 + $0x8] sm:$0xf]
          %v681 = vld [vmem:[%s568 + $0xc] sm:$0xf]
          %v682 = vld [vmem:[%s2] sm:$0xf]
          %v683 = vld [vmem:[%s2 + $0x4] sm:$0xf]
          %v686 = vunpack.c.l.b16 %v682
          %v687 = vunpack.c.l.b16 %v683
          %v688 = vpack.c.b16 %v687, %v686
          %v693 = vunpack.c.l.b16 %v678
          %v694 = vunpack.c.l.b16 %v679
          %v695 = vunpack.c.l.b16 %v680
          %v696 = vunpack.c.l.b16 %v681
          %v697 = vpack.c.b16 %v694, %v693
          %v698 = vpack.c.b16 %v696, %v695
          %vm701 = vcmask 261120
          %v703 = vsel %vm701, %v688, 0
          %705 = vmatprep.subr.bf16.mxu0 0
          %706 = vmatpush1.bf16.msra.mxu0 %v697
          %707 = vmatprep.subr.bf16.mxu0 0
          %708 = vmatpush1.bf16.msra.mxu0 %v698
          %709 = vmatprep.subr.bf16.mxu0 0
          %710 = vmatpush1.bf16.msra.mxu0 0
          %711 = vmatprep.subr.bf16.mxu0 0
          %712 = vmatpush1.bf16.msra.mxu0 0
          %713 = vmatprep.subr.bf16.mxu0 0
          %714 = vmatpush1.bf16.msra.mxu0 0
          %715 = vmatprep.subr.bf16.mxu0 0
          %716 = vmatpush1.bf16.msra.mxu0 0
          %717 = vmatprep.subr.bf16.mxu0 0
          %718 = vmatpush1.bf16.msra.mxu0 0
          %719 = vmatprep.subr.bf16.mxu0 0
          %720 = vmatpush1.bf16.msra.mxu0 0
          %721 = vmatprep.subr.bf16.mxu0 0
          %722 = vmatpush1.bf16.msra.mxu0 0
          %723 = vmatprep.subr.bf16.mxu0 0
          %724 = vmatpush1.bf16.msra.mxu0 0
          %725 = vmatprep.subr.bf16.mxu0 0
          %726 = vmatpush1.bf16.msra.mxu0 0
          %727 = vmatprep.subr.bf16.mxu0 0
          %728 = vmatpush1.bf16.msra.mxu0 0
          %729 = vmatprep.subr.bf16.mxu0 0
          %730 = vmatpush1.bf16.msra.mxu0 0
          %731 = vmatprep.subr.bf16.mxu0 0
          %732 = vmatpush1.bf16.msra.mxu0 0
          %733 = vmatprep.subr.bf16.mxu0 0
          %734 = vmatpush1.bf16.msra.mxu0 0
          %735 = vmatprep.subr.bf16.mxu0 0
          %736 = vmatpush1.bf16.msra.mxu0 0
          %737 = vmatprep.mubr.bf16.mxu0 0
          %738 = vmatmul.mubr.bf16.gmra.mrb[0].mxu0 %v703
          %v739 = vpop.f32.mrb[0].mxu0
          %v740 = vadd.f32 0.0, %v739
          %v741 = vpop.f32.mrb[0].mxu0
          %v742 = vpop.f32.mrb[0].mxu0
          %v743 = vadd.f32 0.0, %v742
          %v744 = vpop.f32.mrb[0].mxu0
          %745 = vdwg.mxu0
          %v746 = vld [vmem:[%s3] sm:$0xff]
          %v747 = vld [vmem:[%s3 + $0x8] sm:$0xff]
          %749 = vset.pattern.permute.xlu0 0
          %750 = vperm.xlu0 %749, %v746
          %v751 = vpop.permute.xlu0 %750
          %754 = vset.pattern.permute.xlu0 0
          %755 = vperm.xlu0 %754, %v747
          %v756 = vpop.permute.xlu0 %755
          %v758 = vmul.f32 %v740, %v751
          %v759 = vmul.f32 %v743, %v756
          %v760 = vld [vmem:[%s4] sm:$0xff]
          %v761 = vld [vmem:[%s4 + $0x8] sm:$0xff]
          %763 = vset.pattern.permute.xlu0 0
          %764 = vperm.xlu0 %763, %v760
          %v765 = vpop.permute.xlu0 %764
          %768 = vset.pattern.permute.xlu0 0
          %769 = vperm.xlu0 %768, %v761
          %v770 = vpop.permute.xlu0 %769
          %v772 = vadd.f32 %v758, %v765
          %v773 = vadd.f32 %v759, %v770
          %v774 = vmax.f32 %v772, 0.0
          %v775 = vmax.f32 %v773, 0.0
          %v776 = vld [vmem:[%s5] sm:$0xf]
          %v777 = vld [vmem:[%s5 + $0x4] sm:$0xf]
          %v778 = vpack.c.bf16 %v775, %v774
          %v781 = vunpack.c.l.b16 %v776
          %v782 = vunpack.c.l.b16 %v777
          %v783 = vpack.c.b16 %v782, %v781
          %vm784 = vcmask 130048
          %v786 = vsel %vm784, %v783, 0
          %788 = vmatprep.subr.bf16.mxu0 0
          %789 = vmatpush1.bf16.msra.mxu0 %v778
          %790 = vmatprep.subr.bf16.mxu0 0
          %791 = vmatpush1.bf16.msra.mxu0 0
          %792 = vmatprep.subr.bf16.mxu0 0
          %793 = vmatpush1.bf16.msra.mxu0 0
          %794 = vmatprep.subr.bf16.mxu0 0
          %795 = vmatpush1.bf16.msra.mxu0 0
          %796 = vmatprep.subr.bf16.mxu0 0
          %797 = vmatpush1.bf16.msra.mxu0 0
          %798 = vmatprep.subr.bf16.mxu0 0
          %799 = vmatpush1.bf16.msra.mxu0 0
          %800 = vmatprep.subr.bf16.mxu0 0
          %801 = vmatpush1.bf16.msra.mxu0 0
          %802 = vmatprep.subr.bf16.mxu0 0
          %803 = vmatpush1.bf16.msra.mxu0 0
          %804 = vmatprep.subr.bf16.mxu0 0
          %805 = vmatpush1.bf16.msra.mxu0 0
          %806 = vmatprep.subr.bf16.mxu0 0
          %807 = vmatpush1.bf16.msra.mxu0 0
          %808 = vmatprep.subr.bf16.mxu0 0
          %809 = vmatpush1.bf16.msra.mxu0 0
          %810 = vmatprep.subr.bf16.mxu0 0
          %811 = vmatpush1.bf16.msra.mxu0 0
          %812 = vmatprep.subr.bf16.mxu0 0
          %813 = vmatpush1.bf16.msra.mxu0 0
          %814 = vmatprep.subr.bf16.mxu0 0
          %815 = vmatpush1.bf16.msra.mxu0 0
          %816 = vmatprep.subr.bf16.mxu0 0
          %817 = vmatpush1.bf16.msra.mxu0 0
          %818 = vmatprep.subr.bf16.mxu0 0
          %819 = vmatpush1.bf16.msra.mxu0 0
          %820 = vmatprep.mubr.bf16.mxu0 0
          %821 = vmatmul.mubr.bf16.gmra.mrb[0].mxu0 %v786
          %v822 = vpop.f32.mrb[0].mxu0
          %v823 = vadd.f32 0.0, %v822
          %v824 = vpop.f32.mrb[0].mxu0
          %v825 = vpop.f32.mrb[0].mxu0
          %v826 = vadd.f32 0.0, %v825
          %v827 = vpop.f32.mrb[0].mxu0
          %828 = vdwg.mxu0
          %v829 = vld [vmem:[%s6] sm:$0xff]
          %v830 = vld [vmem:[%s6 + $0x8] sm:$0xff]
          %832 = vset.pattern.permute.xlu0 0
          %833 = vperm.xlu0 %832, %v829
          %v834 = vpop.permute.xlu0 %833
          %837 = vset.pattern.permute.xlu0 0
          %838 = vperm.xlu0 %837, %v830
          %v839 = vpop.permute.xlu0 %838
          %v841 = vmul.f32 %v823, %v834
          %v842 = vmul.f32 %v826, %v839
          %v843 = vld [vmem:[%s7] sm:$0xff]
          %v844 = vld [vmem:[%s7 + $0x8] sm:$0xff]
          %846 = vset.pattern.permute.xlu0 0
          %847 = vperm.xlu0 %846, %v843
          %v848 = vpop.permute.xlu0 %847
          %851 = vset.pattern.permute.xlu0 0
          %852 = vperm.xlu0 %851, %v844
          %v853 = vpop.permute.xlu0 %852
          %v855 = vadd.f32 %v841, %v848
          %v856 = vadd.f32 %v842, %v853
          %v857 = vmax.f32 %v855, 0.0
          %v858 = vmax.f32 %v856, 0.0
          %v859 = vld [vmem:[#allocation2] sm:$0xff]
          %v860 = vpack.c.bf16 %v858, %v857
          %861 = vxpose.xlu0.c.b16.start [1/8] %v859, 128
          %862 = vxpose.xlu0.c.b16.cont [2/8] 0, 128
          %863 = vxpose.xlu0.c.b16.cont [3/8] 0, 128
          %864 = vxpose.xlu0.c.b16.cont [4/8] 0, 128
          %865 = vxpose.xlu0.c.b16.cont [5/8] 0, 128
          %866 = vxpose.xlu0.c.b16.cont [6/8] 0, 128
          %867 = vxpose.xlu0.c.b16.cont [7/8] 0, 128
          %868 = vxpose.xlu0.c.b16.end [8/8] 0, 128
          %v869 = vpop.trf.xlu0
          %v870 = vpop.trf.xlu0
          %v871 = vpop.trf.xlu0
          %v872 = vpop.trf.xlu0
          %v873 = vpop.trf.xlu0
          %v874 = vpop.trf.xlu0
          %v875 = vpop.trf.xlu0
          %v876 = vpop.trf.xlu0
          %v878 = vsel %vm784, %v869, 0
          %880 = vmatprep.subr.bf16.mxu0 0
          %881 = vmatpush1.bf16.msra.mxu0 %v860
          %882 = vmatprep.subr.bf16.mxu0 0
          %883 = vmatpush1.bf16.msra.mxu0 0
          %884 = vmatprep.subr.bf16.mxu0 0
          %885 = vmatpush1.bf16.msra.mxu0 0
          %886 = vmatprep.subr.bf16.mxu0 0
          %887 = vmatpush1.bf16.msra.mxu0 0
          %888 = vmatprep.subr.bf16.mxu0 0
          %889 = vmatpush1.bf16.msra.mxu0 0
          %890 = vmatprep.subr.bf16.mxu0 0
          %891 = vmatpush1.bf16.msra.mxu0 0
          %892 = vmatprep.subr.bf16.mxu0 0
          %893 = vmatpush1.bf16.msra.mxu0 0
          %894 = vmatprep.subr.bf16.mxu0 0
          %895 = vmatpush1.bf16.msra.mxu0 0
          %896 = vmatprep.subr.bf16.mxu0 0
          %897 = vmatpush1.bf16.msra.mxu0 0
          %898 = vmatprep.subr.bf16.mxu0 0
          %899 = vmatpush1.bf16.msra.mxu0 0
          %900 = vmatprep.subr.bf16.mxu0 0
          %901 = vmatpush1.bf16.msra.mxu0 0
          %902 = vmatprep.subr.bf16.mxu0 0
          %903 = vmatpush1.bf16.msra.mxu0 0
          %904 = vmatprep.subr.bf16.mxu0 0
          %905 = vmatpush1.bf16.msra.mxu0 0
          %906 = vmatprep.subr.bf16.mxu0 0
          %907 = vmatpush1.bf16.msra.mxu0 0
          %908 = vmatprep.subr.bf16.mxu0 0
          %909 = vmatpush1.bf16.msra.mxu0 0
          %910 = vmatprep.subr.bf16.mxu0 0
          %911 = vmatpush1.bf16.msra.mxu0 0
          %912 = vmatprep.mubr.bf16.mxu0 0
          %913 = vmatmul.mubr.bf16.gmra.mrb[0].mxu0 %v878
          %v914 = vpop.f32.mrb[0].mxu0
          %v915 = vadd.f32 0.0, %v914
          %v916 = vpop.f32.mrb[0].mxu0
          %v917 = vpop.f32.mrb[0].mxu0
          %v918 = vpop.f32.mrb[0].mxu0
          %919 = vdwg.mxu0
          %s920 = smul.u32 %s37, 8
          %s921 = scalar_lea.vmem [#allocation6], %s920
          %vm922 = vcmask 523264
          %923 = vst.msk [vmem:[%s921] sm:$0xff] %vm922, %v915
          %v924 = vsel %vm922, %v915, -inf
          %925 = vmax.xlane.f32.xlu0 %v924
          %v926 = vpop.xlane.xlu0 %925
          %v927 = vld [vmem:[#allocation4] sm:$0xff]
          %v928 = vmax.f32 %v927, %v926
          %v929 = vld [vmem:[#allocation5] sm:$0xff]
          %v930 = vsub.f32 %v927, %v928
          %v931 = vmul.f32 %v930, 1.442695
          %v932 = vpow.pop %v931
          %v933 = vmul.f32 %v929, %v932
          %935 = vset.pattern.permute.xlu0 0
          %936 = vperm.xlu0 %935, %v928
          %v937 = vpop.permute.xlu0 %936
          %v939 = vsub.f32 %v915, %v937
          %v940 = vmul.f32 %v939, 1.442695
          %v941 = vpow.pop %v940
          %v942 = vsel %vm922, %v941, 0.0
          %943 = vadd.xlane.f32.xlu0 %v942
          %v944 = vpop.xlane.xlu0 %943
          %v945 = vadd.f32 %v933, %v944
          %vm946 = vcmask 7168
          %947 = vst.msk [vmem:[#allocation5] sm:$0xff] %vm946, %v945
          %948 = vst.msk [vmem:[#allocation4] sm:$0xff] %vm946, %v928
        $region88: #{tpu_custom_call.1} parent=83 // pred_fallthru
          _
        %p949 = scmp.eq.s32.totalorder %s36, 1
        // Predicated region
        $region93: #{tpu_custom_call.1} parent=83 // pred_check
          %p950 = pneg %p949
        $region94: #{tpu_custom_call.1} parent=83 // pred_check_branch
          %952 = sbr.rel (%p950) target = $region96
        $region95: #{tpu_custom_call.1} parent=83 // pred_region
          %v953 = vld [vmem:[%s568] sm:$0xf]
          %v954 = vld [vmem:[%s568 + $0x4] sm:$0xf]
          %v955 = vld [vmem:[%s568 + $0x8] sm:$0xf]
          %v956 = vld [vmem:[%s568 + $0xc] sm:$0xf]
          %s957 = smul.u32 %s37, 8
          %s958 = scalar_lea.vmem [#allocation6], %s957
          %v959 = vld [vmem:[%s958] sm:$0xff]
          %v960 = vld [vmem:[#allocation4] sm:$0xff]
          %962 = vset.pattern.permute.xlu0 0
          %963 = vperm.xlu0 %962, %v960
          %v964 = vpop.permute.xlu0 %963
          %v966 = vsub.f32 %v959, %v964
          %v967 = vmul.f32 %v966, 1.442695
          %v968 = vpow.pop %v967
          %v969 = vld [vmem:[#allocation5] sm:$0xff]
          %v970 = vrcp.pop %v969
          %972 = vset.pattern.permute.xlu0 0
          %973 = vperm.xlu0 %972, %v970
          %v974 = vpop.permute.xlu0 %973
          %v976 = vmul.f32 %v968, %v974
          %v977 = vld [vmem:[#allocation3] sm:$0xff]
          %v978 = vpack.c.bf16 %v976, %v976
          %vm979 = vcmask 64512
          %v981 = vsel %vm979, %v977, 0
          %vm983 = vcmask 1043456
          %v985 = vsel %vm983, %v978, 0
          %987 = vmatprep.subr.bf16.mxu0 0
          %988 = vmatpush1.bf16.msra.mxu0 %v985
          %989 = vmatprep.subr.bf16.mxu0 0
          %990 = vmatpush1.bf16.msra.mxu0 0
          %991 = vmatprep.subr.bf16.mxu0 0
          %992 = vmatpush1.bf16.msra.mxu0 0
          %993 = vmatprep.subr.bf16.mxu0 0
          %994 = vmatpush1.bf16.msra.mxu0 0
          %995 = vmatprep.subr.bf16.mxu0 0
          %996 = vmatpush1.bf16.msra.mxu0 0
          %997 = vmatprep.subr.bf16.mxu0 0
          %998 = vmatpush1.bf16.msra.mxu0 0
          %999 = vmatprep.subr.bf16.mxu0 0
          %1000 = vmatpush1.bf16.msra.mxu0 0
          %1001 = vmatprep.subr.bf16.mxu0 0
          %1002 = vmatpush1.bf16.msra.mxu0 0
          %1003 = vmatprep.subr.bf16.mxu0 0
          %1004 = vmatpush1.bf16.msra.mxu0 0
          %1005 = vmatprep.subr.bf16.mxu0 0
          %1006 = vmatpush1.bf16.msra.mxu0 0
          %1007 = vmatprep.subr.bf16.mxu0 0
          %1008 = vmatpush1.bf16.msra.mxu0 0
          %1009 = vmatprep.subr.bf16.mxu0 0
          %1010 = vmatpush1.bf16.msra.mxu0 0
          %1011 = vmatprep.subr.bf16.mxu0 0
          %1012 = vmatpush1.bf16.msra.mxu0 0
          %1013 = vmatprep.subr.bf16.mxu0 0
          %1014 = vmatpush1.bf16.msra.mxu0 0
          %1015 = vmatprep.subr.bf16.mxu0 0
          %1016 = vmatpush1.bf16.msra.mxu0 0
          %1017 = vmatprep.subr.bf16.mxu0 0
          %1018 = vmatpush1.bf16.msra.mxu0 0
          %1019 = vmatprep.mubr.bf16.mxu0 0
          %1020 = vmatmul.mubr.bf16.gmra.mrb[0].mxu0 %v981
          %v1021 = vpop.f32.mrb[0].mxu0
          %v1022 = vadd.f32 0.0, %v1021
          %v1023 = vpop.f32.mrb[0].mxu0
          %v1024 = vpop.f32.mrb[0].mxu0
          %v1025 = vadd.f32 0.0, %v1024
          %v1026 = vpop.f32.mrb[0].mxu0
          %1027 = vdwg.mxu0
          %v1028 = vld [vmem:[%s9] sm:$0xf]
          %v1029 = vld [vmem:[%s9 + $0x4] sm:$0xf]
          %v1030 = vld [vmem:[%s9 + $0x8] sm:$0xf]
          %v1031 = vld [vmem:[%s9 + $0xc] sm:$0xf]
          %v1032 = vpack.c.bf16 %v1025, %v1022
          %v1037 = vunpack.c.l.b16 %v1028
          %v1038 = vunpack.c.l.b16 %v1029
          %v1039 = vunpack.c.l.b16 %v1030
          %v1040 = vunpack.c.l.b16 %v1031
          %v1041 = vpack.c.b16 %v1038, %v1037
          %v1042 = vpack.c.b16 %v1040, %v1039
          %vm1043 = vcmask 130048
          %v1045 = vsel %vm1043, %v1041, 0
          %v1048 = vsel %vm1043, %v1042, 0
          %1050 = vmatprep.subr.bf16.mxu0 0
          %1051 = vmatpush1.bf16.msra.mxu0 %v1032
          %1052 = vmatprep.subr.bf16.mxu0 0
          %1053 = vmatpush1.bf16.msra.mxu0 0
          %1054 = vmatprep.subr.bf16.mxu0 0
          %1055 = vmatpush1.bf16.msra.mxu0 0
          %1056 = vmatprep.subr.bf16.mxu0 0
          %1057 = vmatpush1.bf16.msra.mxu0 0
          %1058 = vmatprep.subr.bf16.mxu0 0
          %1059 = vmatpush1.bf16.msra.mxu0 0
          %1060 = vmatprep.subr.bf16.mxu0 0
          %1061 = vmatpush1.bf16.msra.mxu0 0
          %1062 = vmatprep.subr.bf16.mxu0 0
          %1063 = vmatpush1.bf16.msra.mxu0 0
          %1064 = vmatprep.subr.bf16.mxu0 0
          %1065 = vmatpush1.bf16.msra.mxu0 0
          %1066 = vmatprep.subr.bf16.mxu0 0
          %1067 = vmatpush1.bf16.msra.mxu0 0
          %1068 = vmatprep.subr.bf16.mxu0 0
          %1069 = vmatpush1.bf16.msra.mxu0 0
          %1070 = vmatprep.subr.bf16.mxu0 0
          %1071 = vmatpush1.bf16.msra.mxu0 0
          %1072 = vmatprep.subr.bf16.mxu0 0
          %1073 = vmatpush1.bf16.msra.mxu0 0
          %1074 = vmatprep.subr.bf16.mxu0 0
          %1075 = vmatpush1.bf16.msra.mxu0 0
          %1076 = vmatprep.subr.bf16.mxu0 0
          %1077 = vmatpush1.bf16.msra.mxu0 0
          %1078 = vmatprep.subr.bf16.mxu0 0
          %1079 = vmatpush1.bf16.msra.mxu0 0
          %1080 = vmatprep.subr.bf16.mxu0 0
          %1081 = vmatpush1.bf16.msra.mxu0 0
          %1082 = vmatprep.mubr.bf16.mxu0 0
          %1083 = vmatmul.mubr.bf16.gmra.mrb[0].mxu0 %v1045
          %v1084 = vpop.f32.mrb[0].mxu0
          %v1085 = vadd.f32 0.0, %v1084
          %v1086 = vpop.f32.mrb[0].mxu0
          %v1087 = vpop.f32.mrb[0].mxu0
          %v1088 = vadd.f32 0.0, %v1087
          %v1089 = vpop.f32.mrb[0].mxu0
          %1090 = vmatprep.mubr.bf16.mxu0 0
          %1091 = vmatmul.mubr.bf16.gmra.mrb[0].mxu0 %v1048
          %v1092 = vpop.f32.mrb[0].mxu0
          %v1093 = vadd.f32 0.0, %v1092
          %v1094 = vpop.f32.mrb[0].mxu0
          %v1095 = vpop.f32.mrb[0].mxu0
          %v1096 = vadd.f32 0.0, %v1095
          %v1097 = vpop.f32.mrb[0].mxu0
          %1098 = vdwg.mxu0
          %v1099 = vld [vmem:[%s10] sm:$0xff]
          %v1100 = vld [vmem:[%s10 + $0x8] sm:$0xff]
          %v1101 = vld [vmem:[%s10 + $0x10] sm:$0xff]
          %v1102 = vld [vmem:[%s10 + $0x18] sm:$0xff]
          %1104 = vset.pattern.permute.xlu0 0
          %1105 = vperm.xlu0 %1104, %v1099
          %v1106 = vpop.permute.xlu0 %1105
          %1109 = vset.pattern.permute.xlu0 0
          %1110 = vperm.xlu0 %1109, %v1100
          %v1111 = vpop.permute.xlu0 %1110
          %1114 = vset.pattern.permute.xlu0 0
          %1115 = vperm.xlu0 %1114, %v1101
          %v1116 = vpop.permute.xlu0 %1115
          %1119 = vset.pattern.permute.xlu0 0
          %1120 = vperm.xlu0 %1119, %v1102
          %v1121 = vpop.permute.xlu0 %1120
          %v1123 = vmul.f32 %v1085, %v1106
          %v1124 = vmul.f32 %v1088, %v1111
          %v1125 = vmul.f32 %v1093, %v1116
          %v1126 = vmul.f32 %v1096, %v1121
          %v1127 = vld [vmem:[%s11] sm:$0xff]
          %v1128 = vld [vmem:[%s11 + $0x8] sm:$0xff]
          %v1129 = vld [vmem:[%s11 + $0x10] sm:$0xff]
          %v1130 = vld [vmem:[%s11 + $0x18] sm:$0xff]
          %1132 = vset.pattern.permute.xlu0 0
          %1133 = vperm.xlu0 %1132, %v1127
          %v1134 = vpop.permute.xlu0 %1133
          %1137 = vset.pattern.permute.xlu0 0
          %1138 = vperm.xlu0 %1137, %v1128
          %v1139 = vpop.permute.xlu0 %1138
          %1142 = vset.pattern.permute.xlu0 0
          %1143 = vperm.xlu0 %1142, %v1129
          %v1144 = vpop.permute.xlu0 %1143
          %1147 = vset.pattern.permute.xlu0 0
          %1148 = vperm.xlu0 %1147, %v1130
          %v1149 = vpop.permute.xlu0 %1148
          %v1151 = vadd.f32 %v1123, %v1134
          %v1152 = vadd.f32 %v1124, %v1139
          %v1153 = vadd.f32 %v1125, %v1144
          %v1154 = vadd.f32 %v1126, %v1149
          %v1155 = vmax.f32 %v1151, 0.0
          %v1156 = vmax.f32 %v1152, 0.0
          %v1157 = vmax.f32 %v1153, 0.0
          %v1158 = vmax.f32 %v1154, 0.0
          %v1159 = vld [vmem:[%s12] sm:$0xf]
          %v1160 = vld [vmem:[%s12 + $0x4] sm:$0xf]
          %v1161 = vld [vmem:[%s12 + $0x8] sm:$0xf]
          %v1162 = vld [vmem:[%s12 + $0xc] sm:$0xf]
          %v1163 = vpack.c.bf16 %v1156, %v1155
          %v1164 = vpack.c.bf16 %v1158, %v1157
          %v1165 = vld [vmem:[%s13] sm:$0xf]
          %v1166 = vld [vmem:[%s13 + $0x4] sm:$0xf]
          %v1167 = vld [vmem:[%s13 + $0x8] sm:$0xf]
          %v1168 = vld [vmem:[%s13 + $0xc] sm:$0xf]
          %v1173 = vunpack.c.l.b16 %v1165
          %v1174 = vunpack.c.l.b16 %v1166
          %v1175 = vunpack.c.l.b16 %v1167
          %v1176 = vunpack.c.l.b16 %v1168
          %v1177 = vpack.c.b16 %v1174, %v1173
          %v1178 = vpack.c.b16 %v1176, %v1175
          %v1183 = vunpack.c.l.b16 %v953
          %v1184 = vunpack.c.l.b16 %v954
          %v1185 = vunpack.c.l.b16 %v955
          %v1186 = vunpack.c.l.b16 %v956
          %v1187 = vpack.c.b16 %v1184, %v1183
          %v1188 = vpack.c.b16 %v1186, %v1185
          %vm1191 = vcmask 261120
          %v1193 = vsel %vm1191, %v1177, 0
          %v1196 = vsel %vm1191, %v1178, 0
          %1198 = vmatprep.subr.bf16.mxu0 0
          %1199 = vmatpush1.bf16.msra.mxu0 %v1187
          %1200 = vmatprep.subr.bf16.mxu0 0
          %1201 = vmatpush1.bf16.msra.mxu0 %v1188
          %1202 = vmatprep.subr.bf16.mxu0 0
          %1203 = vmatpush1.bf16.msra.mxu0 0
          %1204 = vmatprep.subr.bf16.mxu0 0
          %1205 = vmatpush1.bf16.msra.mxu0 0
          %1206 = vmatprep.subr.bf16.mxu0 0
          %1207 = vmatpush1.bf16.msra.mxu0 0
          %1208 = vmatprep.subr.bf16.mxu0 0
          %1209 = vmatpush1.bf16.msra.mxu0 0
          %1210 = vmatprep.subr.bf16.mxu0 0
          %1211 = vmatpush1.bf16.msra.mxu0 0
          %1212 = vmatprep.subr.bf16.mxu0 0
          %1213 = vmatpush1.bf16.msra.mxu0 0
          %1214 = vmatprep.subr.bf16.mxu0 0
          %1215 = vmatpush1.bf16.msra.mxu0 0
          %1216 = vmatprep.subr.bf16.mxu0 0
          %1217 = vmatpush1.bf16.msra.mxu0 0
          %1218 = vmatprep.subr.bf16.mxu0 0
          %1219 = vmatpush1.bf16.msra.mxu0 0
          %1220 = vmatprep.subr.bf16.mxu0 0
          %1221 = vmatpush1.bf16.msra.mxu0 0
          %1222 = vmatprep.subr.bf16.mxu0 0
          %1223 = vmatpush1.bf16.msra.mxu0 0
          %1224 = vmatprep.subr.bf16.mxu0 0
          %1225 = vmatpush1.bf16.msra.mxu0 0
          %1226 = vmatprep.subr.bf16.mxu0 0
          %1227 = vmatpush1.bf16.msra.mxu0 0
          %1228 = vmatprep.subr.bf16.mxu0 0
          %1229 = vmatpush1.bf16.msra.mxu0 0
          %1230 = vmatprep.mubr.bf16.mxu0 0
          %1231 = vmatmul.mubr.bf16.gmra.mrb[0].mxu0 %v1193
          %v1232 = vpop.f32.mrb[0].mxu0
          %v1233 = vadd.f32 0.0, %v1232
          %v1234 = vpop.f32.mrb[0].mxu0
          %v1235 = vpop.f32.mrb[0].mxu0
          %v1236 = vadd.f32 0.0, %v1235
          %v1237 = vpop.f32.mrb[0].mxu0
          %1238 = vmatprep.mubr.bf16.mxu0 0
          %1239 = vmatmul.mubr.bf16.gmra.mrb[0].mxu0 %v1196
          %v1240 = vpop.f32.mrb[0].mxu0
          %v1241 = vadd.f32 0.0, %v1240
          %v1242 = vpop.f32.mrb[0].mxu0
          %v1243 = vpop.f32.mrb[0].mxu0
          %v1244 = vadd.f32 0.0, %v1243
          %v1245 = vpop.f32.mrb[0].mxu0
          %1246 = vdwg.mxu0
          %v1251 = vunpack.c.l.b16 %v1159
          %v1252 = vunpack.c.l.b16 %v1160
          %v1253 = vunpack.c.l.b16 %v1161
          %v1254 = vunpack.c.l.b16 %v1162
          %v1255 = vpack.c.b16 %v1252, %v1251
          %v1256 = vpack.c.b16 %v1254, %v1253
          %v1258 = vsel %vm1191, %v1255, 0
          %v1261 = vsel %vm1191, %v1256, 0
          %1263 = vmatprep.subr.bf16.mxu0 0
          %1264 = vmatpush1.bf16.msra.mxu0 %v1163
          %1265 = vmatprep.subr.bf16.mxu0 0
          %1266 = vmatpush1.bf16.msra.mxu0 %v1164
          %1267 = vmatprep.subr.bf16.mxu0 0
          %1268 = vmatpush1.bf16.msra.mxu0 0
          %1269 = vmatprep.subr.bf16.mxu0 0
          %1270 = vmatpush1.bf16.msra.mxu0 0
          %1271 = vmatprep.subr.bf16.mxu0 0
          %1272 = vmatpush1.bf16.msra.mxu0 0
          %1273 = vmatprep.subr.bf16.mxu0 0
          %1274 = vmatpush1.bf16.msra.mxu0 0
          %1275 = vmatprep.subr.bf16.mxu0 0
          %1276 = vmatpush1.bf16.msra.mxu0 0
          %1277 = vmatprep.subr.bf16.mxu0 0
          %1278 = vmatpush1.bf16.msra.mxu0 0
          %1279 = vmatprep.subr.bf16.mxu0 0
          %1280 = vmatpush1.bf16.msra.mxu0 0
          %1281 = vmatprep.subr.bf16.mxu0 0
          %1282 = vmatpush1.bf16.msra.mxu0 0
          %1283 = vmatprep.subr.bf16.mxu0 0
          %1284 = vmatpush1.bf16.msra.mxu0 0
          %1285 = vmatprep.subr.bf16.mxu0 0
          %1286 = vmatpush1.bf16.msra.mxu0 0
          %1287 = vmatprep.subr.bf16.mxu0 0
          %1288 = vmatpush1.bf16.msra.mxu0 0
          %1289 = vmatprep.subr.bf16.mxu0 0
          %1290 = vmatpush1.bf16.msra.mxu0 0
          %1291 = vmatprep.subr.bf16.mxu0 0
          %1292 = vmatpush1.bf16.msra.mxu0 0
          %1293 = vmatprep.subr.bf16.mxu0 0
          %1294 = vmatpush1.bf16.msra.mxu0 0
          %1295 = vmatprep.mubr.bf16.mxu0 0
          %1296 = vmatmul.mubr.bf16.gmra.mrb[0].mxu0 %v1258
          %v1297 = vpop.f32.mrb[0].mxu0
          %v1298 = vadd.f32 %v1233, %v1297
          %v1299 = vpop.f32.mrb[0].mxu0
          %v1300 = vpop.f32.mrb[0].mxu0
          %v1301 = vadd.f32 %v1236, %v1300
          %v1302 = vpop.f32.mrb[0].mxu0
          %1303 = vmatprep.mubr.bf16.mxu0 0
          %1304 = vmatmul.mubr.bf16.gmra.mrb[0].mxu0 %v1261
          %v1305 = vpop.f32.mrb[0].mxu0
          %v1306 = vadd.f32 %v1241, %v1305
          %v1307 = vpop.f32.mrb[0].mxu0
          %v1308 = vpop.f32.mrb[0].mxu0
          %v1309 = vadd.f32 %v1244, %v1308
          %v1310 = vpop.f32.mrb[0].mxu0
          %1311 = vdwg.mxu0
          %v1312 = vld [vmem:[%s14] sm:$0xff]
          %v1313 = vld [vmem:[%s14 + $0x8] sm:$0xff]
          %v1314 = vld [vmem:[%s14 + $0x10] sm:$0xff]
          %v1315 = vld [vmem:[%s14 + $0x18] sm:$0xff]
          %1317 = vset.pattern.permute.xlu0 0
          %1318 = vperm.xlu0 %1317, %v1312
          %v1319 = vpop.permute.xlu0 %1318
          %1322 = vset.pattern.permute.xlu0 0
          %1323 = vperm.xlu0 %1322, %v1313
          %v1324 = vpop.permute.xlu0 %1323
          %1327 = vset.pattern.permute.xlu0 0
          %1328 = vperm.xlu0 %1327, %v1314
          %v1329 = vpop.permute.xlu0 %1328
          %1332 = vset.pattern.permute.xlu0 0
          %1333 = vperm.xlu0 %1332, %v1315
          %v1334 = vpop.permute.xlu0 %1333
          %v1336 = vmul.f32 %v1298, %v1319
          %v1337 = vmul.f32 %v1301, %v1324
          %v1338 = vmul.f32 %v1306, %v1329
          %v1339 = vmul.f32 %v1309, %v1334
          %v1340 = vld [vmem:[%s15] sm:$0xff]
          %v1341 = vld [vmem:[%s15 + $0x8] sm:$0xff]
          %v1342 = vld [vmem:[%s15 + $0x10] sm:$0xff]
          %v1343 = vld [vmem:[%s15 + $0x18] sm:$0xff]
          %1345 = vset.pattern.permute.xlu0 0
          %1346 = vperm.xlu0 %1345, %v1340
          %v1347 = vpop.permute.xlu0 %1346
          %1350 = vset.pattern.permute.xlu0 0
          %1351 = vperm.xlu0 %1350, %v1341
          %v1352 = vpop.permute.xlu0 %1351
          %1355 = vset.pattern.permute.xlu0 0
          %1356 = vperm.xlu0 %1355, %v1342
          %v1357 = vpop.permute.xlu0 %1356
          %1360 = vset.pattern.permute.xlu0 0
          %1361 = vperm.xlu0 %1360, %v1343
          %v1362 = vpop.permute.xlu0 %1361
          %v1364 = vadd.f32 %v1336, %v1347
          %v1365 = vadd.f32 %v1337, %v1352
          %v1366 = vadd.f32 %v1338, %v1357
          %v1367 = vadd.f32 %v1339, %v1362
          %v1368 = vmax.f32 %v1364, 0.0
          %v1369 = vmax.f32 %v1365, 0.0
          %v1370 = vmax.f32 %v1366, 0.0
          %v1371 = vmax.f32 %v1367, 0.0
          %vm1372 = vcmask 523264
          %1373 = vst.msk [vmem:[%s560] sm:$0xff] %vm1372, %v1368
          %1374 = vst.msk [vmem:[%s560 + $0x8] sm:$0xff] %vm1372, %v1369
          %1375 = vst.msk [vmem:[%s560 + $0x10] sm:$0xff] %vm1372, %v1370
          %1376 = vst.msk [vmem:[%s560 + $0x18] sm:$0xff] %vm1372, %v1371
        $region96: #{tpu_custom_call.1} parent=83 // pred_fallthru
          _
        %s1377 = sand.u32 %s409, 1
        %s1378 = scalar_lea.sflag [#allocation8], %s1377
        %s1379 = sand.u32 %s409, 1
        %s1380 = smul.addr %s1379, 32
        %s1381 = scalar_lea.vmem [#allocation7], %s1380
        // Predicated region
        $region97: #{tpu_custom_call.1} parent=83 // pred_check
          %p1382 = pneg %p419
        $region98: #{tpu_custom_call.1} parent=83 // pred_check_branch
          %1384 = sbr.rel (%p1382) target = $region100
        $region99: #{tpu_custom_call.1} parent=83 // pred_region
          %s1385 = smul.u32 %s36, %s37
          %s1387 = ssub.s32 512, 512
          %1388 = vsyncadd %s1378, %s1387
          %s1389 = smul.addr %s35, 4
          %s1390 = sadd.s32 %s1385, %s1389
          %s1391 = smul.addr %s1390, 128
          %s1392 = scalar_lea.hbm %s16, %s1391
          %s1393 = sshll.u32 %s1381, 4
          %s1394 = int_to_ptr.vmem [resolvable:$true] %s1393
          %1399 = dma.vmem_to_hbm [thread:$0]  %s1394, 512, %s1392, %s1378, 128, 128, 8
        $region100: #{tpu_custom_call.1} parent=83 // pred_fallthru
          _
      $region84: #{tpu_custom_call.1} parent=5 // pred_fallthru
        _
      %p1400 = scmp.le.s32.totalorder 2, %s25
      // Predicated region
      $region101: #{tpu_custom_call.1} parent=5 // pred_check
        %p1401 = pneg %p1400
      $region102: #{tpu_custom_call.1} parent=5 // pred_check_branch
        %1403 = sbr.rel (%p1401) target = $region104
      $region103: #{tpu_custom_call.1} parent=5 // pred_region
        %s1404 = ssub.s32 %s25, 2
        // Predicated region
        $region105: #{tpu_custom_call.1} parent=103 // pred_check
          %p1405 = pneg %p425
        $region106: #{tpu_custom_call.1} parent=103 // pred_check_branch
          %1407 = sbr.rel (%p1405) target = $region108
        $region107: #{tpu_custom_call.1} parent=103 // pred_region
          %s1408 = sand.u32 %s410, 1
          %s1409 = scalar_lea.sflag [#allocation8], %s1408
          %s1410 = sand.u32 %s410, 1
          %s1411 = smul.addr %s1410, 32
          %s1412 = scalar_lea.vmem [#allocation7], %s1411
          %1413 = dma.done %s1409, 512
        $region108: #{tpu_custom_call.1} parent=103 // pred_fallthru
          _
      $region104: #{tpu_custom_call.1} parent=5 // pred_fallthru
        _
    $region6: #{tpu_custom_call.1} parent=1 // loop_footer
      %s29 = sadd.s32 1, %s25
    $region7: #{tpu_custom_call.1} parent=1 // loop_footer_branch
      %24 = sbr.rel target = $region3
    $region8: #{tpu_custom_call.1} parent=1 // loop_exit
      _
    %1414 = vsyncpa [#allocation8], 1
    %s1415 = scalar_lea.sflag [#allocation8], 1
    %1416 = vsyncpa %s1415, 1

</llo_original>
